<compile_context>
chip_gen: v5e
topology: v5e:2x2
jax: 0.10.0
libtpu: 0.0.40
codegen_flags: <defaults>
</compile_context>

<pallas_src>
import functools

import jax
import jax.numpy as jnp
from jax.experimental import pallas as pl
from jax.experimental.pallas import tpu as pltpu


def _fc_encoder_kernel(n_latent,
                       x_ref,
                       w1_ref, b1_ref,
                       w2_ref, b2_ref,
                       w3_ref, b3_ref,
                       w4_ref, b4_ref,
                       wh_ref, bh_ref,
                       out_ref):
    # fc1..fc4: bf16 operands into the MXU, f32 accumulation, f32 bias + ReLU.
    h = jnp.dot(x_ref[...], w1_ref[...],
                preferred_element_type=jnp.float32) + b1_ref[...]
    h = jnp.maximum(h, 0.0).astype(jnp.bfloat16)
    h = jnp.dot(h, w2_ref[...],
                preferred_element_type=jnp.float32) + b2_ref[...]
    h = jnp.maximum(h, 0.0).astype(jnp.bfloat16)
    h = jnp.dot(h, w3_ref[...],
                preferred_element_type=jnp.float32) + b3_ref[...]
    h = jnp.maximum(h, 0.0).astype(jnp.bfloat16)
    h = jnp.dot(h, w4_ref[...],
                preferred_element_type=jnp.float32) + b4_ref[...]
    h = jnp.maximum(h, 0.0).astype(jnp.bfloat16)

    # Fused heads: [mean | std_logit | zero-pad] in one 128-lane-wide matmul.
    heads = jnp.dot(h, wh_ref[...],
                    preferred_element_type=jnp.float32) + bh_ref[...]

    # sigmoid via EUP exp + approx reciprocal; applied only on the std lanes.
    sig = pl.reciprocal(1.0 + jnp.exp(-heads), approx=True)
    lane = jax.lax.broadcasted_iota(jnp.int32, heads.shape, dimension=1)
    is_std = (lane >= n_latent) & (lane < 2 * n_latent)
    out_ref[...] = jnp.where(is_std, sig, heads).astype(out_ref.dtype)


def fc_encoder_forward(x, params, *, batch_tile=None):
    """x: (B, C, H, W) float32.  params: weights (in,out) f32, biases (1,out) f32."""
    B = x.shape[0]
    n_dims_in, n_dims = params["w1"].shape
    n_latent = params["wm"].shape[1]
    head_pad = max(128, ((2 * n_latent + 127) // 128) * 128)  # lane-dense output

    # Glue in plain JAX: flatten + cast matmul operands to bf16.
    x_flat = x.reshape(B, n_dims_in).astype(jnp.bfloat16)

    w1 = params["w1"].astype(jnp.bfloat16)
    w2 = params["w2"].astype(jnp.bfloat16)
    w3 = params["w3"].astype(jnp.bfloat16)
    w4 = params["w4"].astype(jnp.bfloat16)
    b1 = params["b1"].astype(jnp.float32)
    b2 = params["b2"].astype(jnp.float32)
    b3 = params["b3"].astype(jnp.float32)
    b4 = params["b4"].astype(jnp.float32)

    # Fused, 128-lane-padded head weight / bias.
    wh = jnp.zeros((n_dims, head_pad), jnp.float32)
    wh = wh.at[:, :n_latent].set(params["wm"])
    wh = wh.at[:, n_latent:2 * n_latent].set(params["ws"])
    wh = wh.astype(jnp.bfloat16)
    bh = jnp.zeros((1, head_pad), jnp.float32)
    bh = bh.at[:, :n_latent].set(params["bm"])
    bh = bh.at[:, n_latent:2 * n_latent].set(params["bs"])

    # Batch tiling: weights stay VMEM-resident across the grid; x/out tiles
    # double-buffer behind compute.  TB stays far inside v7x's 64 MiB VMEM.
    if batch_tile is None:
        tb = B if B <= 512 else 512
    else:
        tb = batch_tile
    grid = (pl.cdiv(B, tb),)

    resident = lambda i: (0, 0)
    in_specs = [
        pl.BlockSpec((tb, n_dims_in), lambda i: (i, 0)),      # x (batch-tiled)
        pl.BlockSpec((n_dims_in, n_dims), resident),          # w1
        pl.BlockSpec((1, n_dims), resident),                  # b1
        pl.BlockSpec((n_dims, n_dims), resident),              # w2
        pl.BlockSpec((1, n_dims), resident),                  # b2
        pl.BlockSpec((n_dims, n_dims), resident),              # w3
        pl.BlockSpec((1, n_dims), resident),                  # b3
        pl.BlockSpec((n_dims, n_dims), resident),              # w4
        pl.BlockSpec((1, n_dims), resident),                  # b4
        pl.BlockSpec((n_dims, head_pad), resident),            # w_heads
        pl.BlockSpec((1, head_pad), resident),                # b_heads
    ]
    out_specs = pl.BlockSpec((tb, head_pad), lambda i: (i, 0))

    flops = 2 * B * (n_dims_in * n_dims + 3 * n_dims * n_dims + n_dims * head_pad)
    weight_elems = n_dims_in * n_dims + 3 * n_dims * n_dims + n_dims * head_pad
    bias_elems = 4 * n_dims + head_pad
    bytes_accessed = (x_flat.size * 2            # bf16 input
                      + weight_elems * 2         # bf16 weights
                      + bias_elems * 4           # f32 biases
                      + B * head_pad * 4)        # f32 output slab
    cost = pl.CostEstimate(flops=flops,
                           transcendentals=B * head_pad,
                           bytes_accessed=bytes_accessed)

    slab = pl.pallas_call(
        functools.partial(_fc_encoder_kernel, n_latent),
        out_shape=jax.ShapeDtypeStruct((B, head_pad), jnp.float32),
        grid=grid,
        in_specs=in_specs,
        out_specs=out_specs,
        compiler_params=pltpu.CompilerParams(
            dimension_semantics=("parallel",)),
        cost_estimate=cost,
    )(x_flat, w1, b1, w2, b2, w3, b3, w4, b4, wh, bh)

    mean = slab[:, :n_latent]
    std = slab[:, n_latent:2 * n_latent]
    return mean, std


def init_params(key, channels_in, size_in, n_latent, n_dims):
    """PyTorch-Linear-style init: U(-1/sqrt(fan_in), 1/sqrt(fan_in)).

    Weights stored as (in_features, out_features) == PyTorch W.T."""
    n_dims_in = channels_in * size_in * size_in
    dims = [
        ("1", n_dims_in, n_dims),
        ("2", n_dims, n_dims),
        ("3", n_dims, n_dims),
        ("4", n_dims, n_dims),
        ("m", n_dims, n_latent),
        ("s", n_dims, n_latent),
    ]
    params = {}
    for name, fan_in, fan_out in dims:
        key, kw, kb = jax.random.split(key, 3)
        bound = 1.0 / jnp.sqrt(jnp.float32(fan_in))
        params[f"w{name}"] = jax.random.uniform(
            kw, (fan_in, fan_out), jnp.float32, -bound, bound)
        params[f"b{name}"] = jax.random.uniform(
            kb, (1, fan_out), jnp.float32, -bound, bound)
    return params


def reference_forward_mixed(x, params):
    """Pure-JAX reference using the SAME mixed precision as the kernel
    (bf16 matmul operands, f32 accumulation / bias / elementwise)."""
    B = x.shape[0]

    def lin(h, w, b):
        return jnp.dot(h.astype(jnp.bfloat16), w.astype(jnp.bfloat16),
                       preferred_element_type=jnp.float32) + b

    h = x.reshape(B, -1)
    h = jnp.maximum(lin(h, params["w1"], params["b1"]), 0.0)
    h = jnp.maximum(lin(h, params["w2"], params["b2"]), 0.0)
    h = jnp.maximum(lin(h, params["w3"], params["b3"]), 0.0)
    h = jnp.maximum(lin(h, params["w4"], params["b4"]), 0.0)
    mean = lin(h, params["wm"], params["bm"])
    std = jax.nn.sigmoid(lin(h, params["ws"], params["bs"]))
    return mean, std


def reference_forward_f32(x, params):
    """Full-f32 pure-JAX reference matching the PyTorch forward exactly."""
    B = x.shape[0]
    h = x.reshape(B, -1).astype(jnp.float32)
    h = jax.nn.relu(h @ params["w1"] + params["b1"])
    h = jax.nn.relu(h @ params["w2"] + params["b2"])
    h = jax.nn.relu(h @ params["w3"] + params["b3"])
    h = jax.nn.relu(h @ params["w4"] + params["b4"])
    mean = h @ params["wm"] + params["bm"]
    std = jax.nn.sigmoid(h @ params["ws"] + params["bs"])
    return mean, std


if __name__ == "__main__":
    # Small, forward-consistent shapes: x is NCHW with n_dims_in = C*H*W.
    B, C, H, W = 2, 4, 16, 16        # n_dims_in = 1024
    n_dims = 256                     # hidden width (constructor arg n_dims)
    n_latent = 32

    key = jax.random.PRNGKey(0)
    key, kx = jax.random.split(key)
    x = jax.random.normal(kx, (B, C, H, W), jnp.float32)

    params = init_params(key, C, H, n_latent, n_dims)

    mean, std = fc_encoder_forward(x, params)
    mean, std = jax.block_until_ready((mean, std))
    assert mean.shape == (B, n_latent) and std.shape == (B, n_latent)

    # Tight check vs. a reference with identical mixed precision.
    mref_mean, mref_std = reference_forward_mixed(x, params)
    assert jnp.allclose(mean, mref_mean, atol=2e-3, rtol=2e-3)
    assert jnp.allclose(std, mref_std, atol=1e-2, rtol=1e-2)

    # Loose sanity check vs. the full-f32 PyTorch-equivalent forward
    # (bf16 weight quantization accounts for the gap).
    fref_mean, fref_std = reference_forward_f32(x, params)
    assert jnp.allclose(mean, fref_mean, atol=5e-2, rtol=5e-2)
    assert jnp.allclose(std, fref_std, atol=5e-2, rtol=5e-2)
    assert bool(jnp.all((std >= 0.0) & (std <= 1.0)))

    print("KERNEL_OK")
</pallas_src>

<mosaic_0001>
module attributes {stable_mosaic.version = 11 : i64} {
  func.func @_fc_encoder_kernel(%arg0: i32, %arg1: memref<2x1024xbf16, #tpu.memory_space<vmem>>, %arg2: memref<1024x256xbf16, #tpu.memory_space<vmem>>, %arg3: memref<1x256xf32, #tpu.memory_space<vmem>>, %arg4: memref<256x256xbf16, #tpu.memory_space<vmem>>, %arg5: memref<1x256xf32, #tpu.memory_space<vmem>>, %arg6: memref<256x256xbf16, #tpu.memory_space<vmem>>, %arg7: memref<1x256xf32, #tpu.memory_space<vmem>>, %arg8: memref<256x256xbf16, #tpu.memory_space<vmem>>, %arg9: memref<1x256xf32, #tpu.memory_space<vmem>>, %arg10: memref<256x128xbf16, #tpu.memory_space<vmem>>, %arg11: memref<1x128xf32, #tpu.memory_space<vmem>>, %arg12: memref<2x128xf32, #tpu.memory_space<vmem>>) attributes {dimension_semantics = [#tpu.dimension_semantics<parallel>], iteration_bounds = array<i64: 1>, scalar_prefetch = 0 : i64, scratch_operands = 0 : i64, tpu.core_type = #tpu.core_type<tc>, window_params = [{transform_indices = @transform_0, window_bounds = array<i64: 2, 1024>}, {pipeline_mode = #tpu.pipeline_mode<synchronous>, transform_indices = @transform_1, window_bounds = array<i64: 1024, 256>}, {pipeline_mode = #tpu.pipeline_mode<synchronous>, transform_indices = @transform_2, window_bounds = array<i64: 1, 256>}, {pipeline_mode = #tpu.pipeline_mode<synchronous>, transform_indices = @transform_3, window_bounds = array<i64: 256, 256>}, {pipeline_mode = #tpu.pipeline_mode<synchronous>, transform_indices = @transform_4, window_bounds = array<i64: 1, 256>}, {pipeline_mode = #tpu.pipeline_mode<synchronous>, transform_indices = @transform_5, window_bounds = array<i64: 256, 256>}, {pipeline_mode = #tpu.pipeline_mode<synchronous>, transform_indices = @transform_6, window_bounds = array<i64: 1, 256>}, {pipeline_mode = #tpu.pipeline_mode<synchronous>, transform_indices = @transform_7, window_bounds = array<i64: 256, 256>}, {pipeline_mode = #tpu.pipeline_mode<synchronous>, transform_indices = @transform_8, window_bounds = array<i64: 1, 256>}, {pipeline_mode = #tpu.pipeline_mode<synchronous>, transform_indices = @transform_9, window_bounds = array<i64: 256, 128>}, {pipeline_mode = #tpu.pipeline_mode<synchronous>, transform_indices = @transform_10, window_bounds = array<i64: 1, 128>}, {transform_indices = @transform_11, window_bounds = array<i64: 2, 128>}]} {
    %c0 = arith.constant 0 : index
    %c0_0 = arith.constant 0 : index
    %0 = vector.load %arg1[%c0, %c0_0] : memref<2x1024xbf16, #tpu.memory_space<vmem>>, vector<2x1024xbf16>
    %c0_1 = arith.constant 0 : index
    %c0_2 = arith.constant 0 : index
    %1 = vector.load %arg2[%c0_1, %c0_2] : memref<1024x256xbf16, #tpu.memory_space<vmem>>, vector<1024x256xbf16>
    %cst = arith.constant dense<0.000000e+00> : vector<2x256xf32>
    %2 = tpu.matmul %0, %1, %cst {dimension_numbers = #tpu.dot_dimension_numbers<[1], [0], [0], [1], [0, 0, 1, 1], [], []>} : vector<2x1024xbf16>, vector<1024x256xbf16>, vector<2x256xf32> -> vector<2x256xf32>
    %c0_3 = arith.constant 0 : index
    %c0_4 = arith.constant 0 : index
    %3 = vector.load %arg3[%c0_3, %c0_4] : memref<1x256xf32, #tpu.memory_space<vmem>>, vector<1x256xf32>
    %4 = vector.broadcast %3 : vector<1x256xf32> to vector<2x256xf32>
    %5 = arith.addf %2, %4 : vector<2x256xf32>
    %cst_5 = arith.constant 0.000000e+00 : f32
    %6 = vector.broadcast %cst_5 : f32 to vector<2x256xf32>
    %7 = arith.maximumf %5, %6 : vector<2x256xf32>
    %8 = arith.truncf %7 : vector<2x256xf32> to vector<2x256xbf16>
    %c0_6 = arith.constant 0 : index
    %c0_7 = arith.constant 0 : index
    %9 = vector.load %arg4[%c0_6, %c0_7] : memref<256x256xbf16, #tpu.memory_space<vmem>>, vector<256x256xbf16>
    %cst_8 = arith.constant dense<0.000000e+00> : vector<2x256xf32>
    %10 = tpu.matmul %8, %9, %cst_8 {dimension_numbers = #tpu.dot_dimension_numbers<[1], [0], [0], [1], [0, 0, 1, 1], [], []>} : vector<2x256xbf16>, vector<256x256xbf16>, vector<2x256xf32> -> vector<2x256xf32>
    %c0_9 = arith.constant 0 : index
    %c0_10 = arith.constant 0 : index
    %11 = vector.load %arg5[%c0_9, %c0_10] : memref<1x256xf32, #tpu.memory_space<vmem>>, vector<1x256xf32>
    %12 = vector.broadcast %11 : vector<1x256xf32> to vector<2x256xf32>
    %13 = arith.addf %10, %12 : vector<2x256xf32>
    %cst_11 = arith.constant 0.000000e+00 : f32
    %14 = vector.broadcast %cst_11 : f32 to vector<2x256xf32>
    %15 = arith.maximumf %13, %14 : vector<2x256xf32>
    %16 = arith.truncf %15 : vector<2x256xf32> to vector<2x256xbf16>
    %c0_12 = arith.constant 0 : index
    %c0_13 = arith.constant 0 : index
    %17 = vector.load %arg6[%c0_12, %c0_13] : memref<256x256xbf16, #tpu.memory_space<vmem>>, vector<256x256xbf16>
    %cst_14 = arith.constant dense<0.000000e+00> : vector<2x256xf32>
    %18 = tpu.matmul %16, %17, %cst_14 {dimension_numbers = #tpu.dot_dimension_numbers<[1], [0], [0], [1], [0, 0, 1, 1], [], []>} : vector<2x256xbf16>, vector<256x256xbf16>, vector<2x256xf32> -> vector<2x256xf32>
    %c0_15 = arith.constant 0 : index
    %c0_16 = arith.constant 0 : index
    %19 = vector.load %arg7[%c0_15, %c0_16] : memref<1x256xf32, #tpu.memory_space<vmem>>, vector<1x256xf32>
    %20 = vector.broadcast %19 : vector<1x256xf32> to vector<2x256xf32>
    %21 = arith.addf %18, %20 : vector<2x256xf32>
    %cst_17 = arith.constant 0.000000e+00 : f32
    %22 = vector.broadcast %cst_17 : f32 to vector<2x256xf32>
    %23 = arith.maximumf %21, %22 : vector<2x256xf32>
    %24 = arith.truncf %23 : vector<2x256xf32> to vector<2x256xbf16>
    %c0_18 = arith.constant 0 : index
    %c0_19 = arith.constant 0 : index
    %25 = vector.load %arg8[%c0_18, %c0_19] : memref<256x256xbf16, #tpu.memory_space<vmem>>, vector<256x256xbf16>
    %cst_20 = arith.constant dense<0.000000e+00> : vector<2x256xf32>
    %26 = tpu.matmul %24, %25, %cst_20 {dimension_numbers = #tpu.dot_dimension_numbers<[1], [0], [0], [1], [0, 0, 1, 1], [], []>} : vector<2x256xbf16>, vector<256x256xbf16>, vector<2x256xf32> -> vector<2x256xf32>
    %c0_21 = arith.constant 0 : index
    %c0_22 = arith.constant 0 : index
    %27 = vector.load %arg9[%c0_21, %c0_22] : memref<1x256xf32, #tpu.memory_space<vmem>>, vector<1x256xf32>
    %28 = vector.broadcast %27 : vector<1x256xf32> to vector<2x256xf32>
    %29 = arith.addf %26, %28 : vector<2x256xf32>
    %cst_23 = arith.constant 0.000000e+00 : f32
    %30 = vector.broadcast %cst_23 : f32 to vector<2x256xf32>
    %31 = arith.maximumf %29, %30 : vector<2x256xf32>
    %32 = arith.truncf %31 : vector<2x256xf32> to vector<2x256xbf16>
    %c0_24 = arith.constant 0 : index
    %c0_25 = arith.constant 0 : index
    %33 = vector.load %arg10[%c0_24, %c0_25] : memref<256x128xbf16, #tpu.memory_space<vmem>>, vector<256x128xbf16>
    %cst_26 = arith.constant dense<0.000000e+00> : vector<2x128xf32>
    %34 = tpu.matmul %32, %33, %cst_26 {dimension_numbers = #tpu.dot_dimension_numbers<[1], [0], [0], [1], [0, 0, 1, 1], [], []>} : vector<2x256xbf16>, vector<256x128xbf16>, vector<2x128xf32> -> vector<2x128xf32>
    %c0_27 = arith.constant 0 : index
    %c0_28 = arith.constant 0 : index
    %35 = vector.load %arg11[%c0_27, %c0_28] : memref<1x128xf32, #tpu.memory_space<vmem>>, vector<1x128xf32>
    %36 = vector.broadcast %35 : vector<1x128xf32> to vector<2x128xf32>
    %37 = arith.addf %34, %36 : vector<2x128xf32>
    %cst_29 = arith.constant 0.000000e+00 : f32
    %38 = vector.broadcast %cst_29 : f32 to vector<2x128xf32>
    %39 = arith.subf %38, %37 : vector<2x128xf32>
    %40 = math.exp %39 : vector<2x128xf32>
    %cst_30 = arith.constant 1.000000e+00 : f32
    %41 = vector.broadcast %cst_30 : f32 to vector<2x128xf32>
    %42 = arith.addf %41, %40 : vector<2x128xf32>
    %43 = tpu.reciprocal %42 {approx = true} : vector<2x128xf32> -> vector<2x128xf32>
    %44 = tpu.iota {dimensions = array<i32: 1>} : vector<2x128xi32>
    %c32_i32 = arith.constant 32 : i32
    %45 = vector.broadcast %c32_i32 : i32 to vector<2x128xi32>
    %46 = arith.cmpi sge, %44, %45 : vector<2x128xi32>
    %c64_i32 = arith.constant 64 : i32
    %47 = vector.broadcast %c64_i32 : i32 to vector<2x128xi32>
    %48 = arith.cmpi slt, %44, %47 : vector<2x128xi32>
    %49 = arith.andi %46, %48 : vector<2x128xi1>
    %50 = arith.select %49, %43, %37 : vector<2x128xi1>, vector<2x128xf32>
    %c0_31 = arith.constant 0 : index
    %c0_32 = arith.constant 0 : index
    %51 = vector.load %arg12[%c0_31, %c0_32] : memref<2x128xf32, #tpu.memory_space<vmem>>, vector<2x128xf32>
    tpu.vector_store %arg12[%c0_31, %c0_32], %50 {strides = array<i32>} : memref<2x128xf32, #tpu.memory_space<vmem>>, vector<2x128xf32>,
    return
  }
  func.func @transform_0(%arg0: i32) -> (i32, i32) {
    %c0_i32 = arith.constant 0 : i32
    %c0_i32_0 = arith.constant 0 : i32
    return %arg0, %c0_i32 : i32, i32
  }
  func.func @transform_1(%arg0: i32) -> (i32, i32) {
    %c0_i32 = arith.constant 0 : i32
    %c0_i32_0 = arith.constant 0 : i32
    %c0_i32_1 = arith.constant 0 : i32
    return %c0_i32, %c0_i32_0 : i32, i32
  }
  func.func @transform_2(%arg0: i32) -> (i32, i32) {
    %c0_i32 = arith.constant 0 : i32
    %c0_i32_0 = arith.constant 0 : i32
    %c0_i32_1 = arith.constant 0 : i32
    return %c0_i32, %c0_i32_0 : i32, i32
  }
  func.func @transform_3(%arg0: i32) -> (i32, i32) {
    %c0_i32 = arith.constant 0 : i32
    %c0_i32_0 = arith.constant 0 : i32
    %c0_i32_1 = arith.constant 0 : i32
    return %c0_i32, %c0_i32_0 : i32, i32
  }
  func.func @transform_4(%arg0: i32) -> (i32, i32) {
    %c0_i32 = arith.constant 0 : i32
    %c0_i32_0 = arith.constant 0 : i32
    %c0_i32_1 = arith.constant 0 : i32
    return %c0_i32, %c0_i32_0 : i32, i32
  }
  func.func @transform_5(%arg0: i32) -> (i32, i32) {
    %c0_i32 = arith.constant 0 : i32
    %c0_i32_0 = arith.constant 0 : i32
    %c0_i32_1 = arith.constant 0 : i32
    return %c0_i32, %c0_i32_0 : i32, i32
  }
  func.func @transform_6(%arg0: i32) -> (i32, i32) {
    %c0_i32 = arith.constant 0 : i32
    %c0_i32_0 = arith.constant 0 : i32
    %c0_i32_1 = arith.constant 0 : i32
    return %c0_i32, %c0_i32_0 : i32, i32
  }
  func.func @transform_7(%arg0: i32) -> (i32, i32) {
    %c0_i32 = arith.constant 0 : i32
    %c0_i32_0 = arith.constant 0 : i32
    %c0_i32_1 = arith.constant 0 : i32
    return %c0_i32, %c0_i32_0 : i32, i32
  }
  func.func @transform_8(%arg0: i32) -> (i32, i32) {
    %c0_i32 = arith.constant 0 : i32
    %c0_i32_0 = arith.constant 0 : i32
    %c0_i32_1 = arith.constant 0 : i32
    return %c0_i32, %c0_i32_0 : i32, i32
  }
  func.func @transform_9(%arg0: i32) -> (i32, i32) {
    %c0_i32 = arith.constant 0 : i32
    %c0_i32_0 = arith.constant 0 : i32
    %c0_i32_1 = arith.constant 0 : i32
    return %c0_i32, %c0_i32_0 : i32, i32
  }
  func.func @transform_10(%arg0: i32) -> (i32, i32) {
    %c0_i32 = arith.constant 0 : i32
    %c0_i32_0 = arith.constant 0 : i32
    %c0_i32_1 = arith.constant 0 : i32
    return %c0_i32, %c0_i32_0 : i32, i32
  }
  func.func @transform_11(%arg0: i32) -> (i32, i32) {
    %c0_i32 = arith.constant 0 : i32
    %c0_i32_0 = arith.constant 0 : i32
    return %arg0, %c0_i32 : i32, i32
  }
}

</mosaic_0001>

<llo_original>
// kernel: tpu_custom_call.1
$region0: #{tpu_custom_call.1}
  #allocation0 [shape = 'u32[]', space=smem, size = 0x4, offset = 0x4, fixed_abs, tag = 'smem constant byte address 0x4 - core index']
  #allocation1 [shape = 'u32[72,128]{1,0:T(1,128)}', space=vmem, size = 0x9000, scoped, tag = 'internal scratch']
  %s0 = inlined_call_operand.hbm [shape: bf16[2,1024], index: 0, kind: input, shape index: {}]
  %s1 = inlined_call_operand.hbm [shape: bf16[1024,256], index: 1, kind: input, shape index: {}]
  %s2 = inlined_call_operand.hbm [shape: f32[1,256], index: 2, kind: input, shape index: {}]
  %s3 = inlined_call_operand.hbm [shape: bf16[256,256], index: 3, kind: input, shape index: {}]
  %s4 = inlined_call_operand.vmem [shape: f32[1,256], index: 4, kind: input, shape index: {}]
  %s5 = inlined_call_operand.hbm [shape: bf16[256,256], index: 5, kind: input, shape index: {}]
  %s6 = inlined_call_operand.vmem [shape: f32[1,256], index: 6, kind: input, shape index: {}]
  %s7 = inlined_call_operand.hbm [shape: bf16[256,256], index: 7, kind: input, shape index: {}]
  %s8 = inlined_call_operand.vmem [shape: f32[1,256], index: 8, kind: input, shape index: {}]
  %s9 = inlined_call_operand.hbm [shape: bf16[256,128], index: 9, kind: input, shape index: {}]
  %s10 = inlined_call_operand.vmem [shape: f32[1,128], index: 10, kind: input, shape index: {}]
  %s11 = inlined_call_operand.hbm [shape: f32[2,128], index: 11, kind: output, shape index: {}]
  %s12 = sld [smem:[#allocation0]]
  $region82: #{tpu_custom_call.1} parent=0
    _
  %s14 = ssub.s32 1, %s12
  %s15 = scalar_select 0, %s14, %s12
  $region1: #{tpu_custom_call.1} parent=0
    #allocation2 [shape = 'u8[4096]{0}', space=vmem, size = 0x1000, scoped, tag = 'input window, operand 0, single buffered']
    #allocation3 [shape = 's32[1]{0}', space=sflag, size = 0x4, scoped, tag = 'scoped memory for tpu_custom_call.1']
    #allocation4 [shape = 's32[1]{0}', space=sflag, size = 0x4, scoped, tag = 'scoped memory for tpu_custom_call.1']
    #allocation5 [shape = 'u8[524288]{0}', space=vmem, size = 0x80000, scoped, tag = 'input window, operand 1, single buffered']
    #allocation6 [shape = 's32[1]{0}', space=sflag, size = 0x4, scoped, tag = 'scoped memory for tpu_custom_call.1']
    #allocation7 [shape = 'u8[1024]{0}', space=vmem, size = 0x400, scoped, tag = 'input window, operand 2, single buffered']
    #allocation8 [shape = 'u8[131072]{0}', space=vmem, size = 0x20000, scoped, tag = 'input window, operand 3, single buffered']
    #allocation9 [shape = 's32[1]{0}', space=sflag, size = 0x4, scoped, tag = 'scoped memory for tpu_custom_call.1']
    #allocation10 [shape = 'u8[131072]{0}', space=vmem, size = 0x20000, scoped, tag = 'input window, operand 5, single buffered']
    #allocation11 [shape = 'u8[131072]{0}', space=vmem, size = 0x20000, scoped, tag = 'input window, operand 7, single buffered']
    #allocation12 [shape = 's32[1]{0}', space=sflag, size = 0x4, scoped, tag = 'scoped memory for tpu_custom_call.1']
    #allocation13 [shape = 'u8[65536]{0}', space=vmem, size = 0x10000, scoped, tag = 'input window, operand 9, single buffered']
    #allocation14 [shape = 'u8[1024]{0}', space=vmem, size = 0x400, scoped, tag = 'output window, operand 0, single buffered']
    %16 = vsyncpa [#allocation3], 0
    %17 = vsyncpa [#allocation6], 0
    %18 = vsyncpa [#allocation9], 0
    %19 = vsyncpa [#allocation12], 0
    %20 = vsyncpa [#allocation4], 0
    // Predicated region
    $region2: #{tpu_custom_call.1} parent=1 // pred_check
      _
    $region3: #{tpu_custom_call.1} parent=1 // pred_check_branch
      %22 = sbr.rel (0) target = $region5
    $region4: #{tpu_custom_call.1} parent=1 // pred_region
      %24 = vsyncadd [#allocation3], 0
      %s26 = sshll.u32 %s0, 4
      %s27 = int_to_ptr.hbm [resolvable:$true] %s26
      %s28 = sshll.u32 [#allocation2], 4
      %s29 = int_to_ptr.vmem [resolvable:$true] %s28
      %31 = dma.hbm_to_vmem [thread:$0]  %s27, 128, %s29, [#allocation3]
    $region5: #{tpu_custom_call.1} parent=1 // pred_fallthru
      _
    // Predicated region
    $region6: #{tpu_custom_call.1} parent=1 // pred_check
      _
    $region7: #{tpu_custom_call.1} parent=1 // pred_check_branch
      %33 = sbr.rel (0) target = $region9
    $region8: #{tpu_custom_call.1} parent=1 // pred_region
      %35 = vsyncadd [#allocation6], 0
      %s36 = sshll.u32 %s1, 4
      %s37 = int_to_ptr.hbm [resolvable:$true] %s36
      %s38 = sshll.u32 [#allocation5], 4
      %s39 = int_to_ptr.vmem [resolvable:$true] %s38
      %44 = dma.hbm_to_vmem [thread:$0]  %s37, 16384, %s39, [#allocation6], 128, 128, 8
    $region9: #{tpu_custom_call.1} parent=1 // pred_fallthru
      _
    // Predicated region
    $region10: #{tpu_custom_call.1} parent=1 // pred_check
      _
    $region11: #{tpu_custom_call.1} parent=1 // pred_check_branch
      %46 = sbr.rel (0) target = $region13
    $region12: #{tpu_custom_call.1} parent=1 // pred_region
      %48 = vsyncadd [#allocation6], 0
      %s50 = sshll.u32 %s2, 4
      %s51 = int_to_ptr.hbm [resolvable:$true] %s50
      %s52 = sshll.u32 [#allocation7], 4
      %s53 = int_to_ptr.vmem [resolvable:$true] %s52
      %55 = dma.hbm_to_vmem [thread:$0]  %s51, 32, %s53, [#allocation6]
    $region13: #{tpu_custom_call.1} parent=1 // pred_fallthru
      _
    // Predicated region
    $region14: #{tpu_custom_call.1} parent=1 // pred_check
      _
    $region15: #{tpu_custom_call.1} parent=1 // pred_check_branch
      %57 = sbr.rel (0) target = $region17
    $region16: #{tpu_custom_call.1} parent=1 // pred_region
      %59 = vsyncadd [#allocation9], 0
      %s60 = sshll.u32 %s3, 4
      %s61 = int_to_ptr.hbm [resolvable:$true] %s60
      %s62 = sshll.u32 [#allocation8], 4
      %s63 = int_to_ptr.vmem [resolvable:$true] %s62
      %68 = dma.hbm_to_vmem [thread:$0]  %s61, 4096, %s63, [#allocation9], 128, 128, 8
    $region17: #{tpu_custom_call.1} parent=1 // pred_fallthru
      _
    // Predicated region
    $region18: #{tpu_custom_call.1} parent=1 // pred_check
      _
    $region19: #{tpu_custom_call.1} parent=1 // pred_check_branch
      %70 = sbr.rel (0) target = $region21
    $region20: #{tpu_custom_call.1} parent=1 // pred_region
      _
    $region21: #{tpu_custom_call.1} parent=1 // pred_fallthru
      _
    // Predicated region
    $region22: #{tpu_custom_call.1} parent=1 // pred_check
      _
    $region23: #{tpu_custom_call.1} parent=1 // pred_check_branch
      %72 = sbr.rel (0) target = $region25
    $region24: #{tpu_custom_call.1} parent=1 // pred_region
      %74 = vsyncadd [#allocation9], 0
      %s75 = sshll.u32 %s5, 4
      %s76 = int_to_ptr.hbm [resolvable:$true] %s75
      %s77 = sshll.u32 [#allocation10], 4
      %s78 = int_to_ptr.vmem [resolvable:$true] %s77
      %83 = dma.hbm_to_vmem [thread:$0]  %s76, 4096, %s78, [#allocation9], 128, 128, 8
    $region25: #{tpu_custom_call.1} parent=1 // pred_fallthru
      _
    // Predicated region
    $region26: #{tpu_custom_call.1} parent=1 // pred_check
      _
    $region27: #{tpu_custom_call.1} parent=1 // pred_check_branch
      %85 = sbr.rel (0) target = $region29
    $region28: #{tpu_custom_call.1} parent=1 // pred_region
      _
    $region29: #{tpu_custom_call.1} parent=1 // pred_fallthru
      _
    // Predicated region
    $region30: #{tpu_custom_call.1} parent=1 // pred_check
      _
    $region31: #{tpu_custom_call.1} parent=1 // pred_check_branch
      %87 = sbr.rel (0) target = $region33
    $region32: #{tpu_custom_call.1} parent=1 // pred_region
      %89 = vsyncadd [#allocation12], 0
      %s90 = sshll.u32 %s7, 4
      %s91 = int_to_ptr.hbm [resolvable:$true] %s90
      %s92 = sshll.u32 [#allocation11], 4
      %s93 = int_to_ptr.vmem [resolvable:$true] %s92
      %98 = dma.hbm_to_vmem [thread:$0]  %s91, 4096, %s93, [#allocation12], 128, 128, 8
    $region33: #{tpu_custom_call.1} parent=1 // pred_fallthru
      _
    // Predicated region
    $region34: #{tpu_custom_call.1} parent=1 // pred_check
      _
    $region35: #{tpu_custom_call.1} parent=1 // pred_check_branch
      %100 = sbr.rel (0) target = $region37
    $region36: #{tpu_custom_call.1} parent=1 // pred_region
      _
    $region37: #{tpu_custom_call.1} parent=1 // pred_fallthru
      _
    // Predicated region
    $region38: #{tpu_custom_call.1} parent=1 // pred_check
      _
    $region39: #{tpu_custom_call.1} parent=1 // pred_check_branch
      %102 = sbr.rel (0) target = $region41
    $region40: #{tpu_custom_call.1} parent=1 // pred_region
      %104 = vsyncadd [#allocation12], 0
      %s105 = sshll.u32 %s9, 4
      %s106 = int_to_ptr.hbm [resolvable:$true] %s105
      %s107 = sshll.u32 [#allocation13], 4
      %s108 = int_to_ptr.vmem [resolvable:$true] %s107
      %113 = dma.hbm_to_vmem [thread:$0]  %s106, 2048, %s108, [#allocation12], 64, 64, 4
    $region41: #{tpu_custom_call.1} parent=1 // pred_fallthru
      _
    // Predicated region
    $region42: #{tpu_custom_call.1} parent=1 // pred_check
      _
    $region43: #{tpu_custom_call.1} parent=1 // pred_check_branch
      %115 = sbr.rel (0) target = $region45
    $region44: #{tpu_custom_call.1} parent=1 // pred_region
      _
    $region45: #{tpu_custom_call.1} parent=1 // pred_fallthru
      _
    // Predicated region
    $region46: #{tpu_custom_call.1} parent=1 // pred_check
      _
    $region47: #{tpu_custom_call.1} parent=1 // pred_check_branch
      %117 = sbr.rel (0) target = $region49
    $region48: #{tpu_custom_call.1} parent=1 // pred_region
      %119 = dma.done [#allocation3], 128
    $region49: #{tpu_custom_call.1} parent=1 // pred_fallthru
      _
    // Predicated region
    $region50: #{tpu_custom_call.1} parent=1 // pred_check
      _
    $region51: #{tpu_custom_call.1} parent=1 // pred_check_branch
      %121 = sbr.rel (0) target = $region53
    $region52: #{tpu_custom_call.1} parent=1 // pred_region
      %123 = dma.done [#allocation6], 16384
    $region53: #{tpu_custom_call.1} parent=1 // pred_fallthru
      _
    // Predicated region
    $region54: #{tpu_custom_call.1} parent=1 // pred_check
      _
    $region55: #{tpu_custom_call.1} parent=1 // pred_check_branch
      %125 = sbr.rel (0) target = $region57
    $region56: #{tpu_custom_call.1} parent=1 // pred_region
      %127 = dma.done [#allocation6], 32
    $region57: #{tpu_custom_call.1} parent=1 // pred_fallthru
      _
    // Predicated region
    $region58: #{tpu_custom_call.1} parent=1 // pred_check
      _
    $region59: #{tpu_custom_call.1} parent=1 // pred_check_branch
      %129 = sbr.rel (0) target = $region61
    $region60: #{tpu_custom_call.1} parent=1 // pred_region
      %131 = dma.done [#allocation9], 4096
    $region61: #{tpu_custom_call.1} parent=1 // pred_fallthru
      _
    // Predicated region
    $region62: #{tpu_custom_call.1} parent=1 // pred_check
      _
    $region63: #{tpu_custom_call.1} parent=1 // pred_check_branch
      %133 = sbr.rel (0) target = $region65
    $region64: #{tpu_custom_call.1} parent=1 // pred_region
      %135 = dma.done [#allocation9], 4096
    $region65: #{tpu_custom_call.1} parent=1 // pred_fallthru
      _
    // Predicated region
    $region66: #{tpu_custom_call.1} parent=1 // pred_check
      _
    $region67: #{tpu_custom_call.1} parent=1 // pred_check_branch
      %137 = sbr.rel (0) target = $region69
    $region68: #{tpu_custom_call.1} parent=1 // pred_region
      %139 = dma.done [#allocation12], 4096
    $region69: #{tpu_custom_call.1} parent=1 // pred_fallthru
      _
    // Predicated region
    $region70: #{tpu_custom_call.1} parent=1 // pred_check
      _
    $region71: #{tpu_custom_call.1} parent=1 // pred_check_branch
      %141 = sbr.rel (0) target = $region73
    $region72: #{tpu_custom_call.1} parent=1 // pred_region
      %143 = dma.done [#allocation12], 2048
    $region73: #{tpu_custom_call.1} parent=1 // pred_fallthru
      _
    %v144 = vld [vmem:[#allocation2] sm:$0xff]
    %v145 = vld [vmem:[#allocation5] sm:$0xff]
    %v146 = vld [vmem:[#allocation5 + $0x8] sm:$0xff]
    %v147 = vld [vmem:[#allocation5 + $0x10] sm:$0xff]
    %v148 = vld [vmem:[#allocation5 + $0x18] sm:$0xff]
    %v149 = vld [vmem:[#allocation5 + $0x20] sm:$0xff]
    %v150 = vld [vmem:[#allocation5 + $0x28] sm:$0xff]
    %v151 = vld [vmem:[#allocation5 + $0x30] sm:$0xff]
    %v152 = vld [vmem:[#allocation5 + $0x38] sm:$0xff]
    %v153 = vld [vmem:[#allocation5 + $0x40] sm:$0xff]
    %v154 = vld [vmem:[#allocation5 + $0x48] sm:$0xff]
    %v155 = vld [vmem:[#allocation5 + $0x50] sm:$0xff]
    %v156 = vld [vmem:[#allocation5 + $0x58] sm:$0xff]
    %v157 = vld [vmem:[#allocation5 + $0x60] sm:$0xff]
    %v158 = vld [vmem:[#allocation5 + $0x68] sm:$0xff]
    %v159 = vld [vmem:[#allocation5 + $0x70] sm:$0xff]
    %v160 = vld [vmem:[#allocation5 + $0x78] sm:$0xff]
    %v161 = vld [vmem:[#allocation5 + $0x80] sm:$0xff]
    %v162 = vld [vmem:[#allocation5 + $0x88] sm:$0xff]
    %v163 = vld [vmem:[#allocation5 + $0x90] sm:$0xff]
    %v164 = vld [vmem:[#allocation5 + $0x98] sm:$0xff]
    %v165 = vld [vmem:[#allocation5 + $0xa0] sm:$0xff]
    %v166 = vld [vmem:[#allocation5 + $0xa8] sm:$0xff]
    %v167 = vld [vmem:[#allocation5 + $0xb0] sm:$0xff]
    %v168 = vld [vmem:[#allocation5 + $0xb8] sm:$0xff]
    %v169 = vld [vmem:[#allocation5 + $0xc0] sm:$0xff]
    %v170 = vld [vmem:[#allocation5 + $0xc8] sm:$0xff]
    %v171 = vld [vmem:[#allocation5 + $0xd0] sm:$0xff]
    %v172 = vld [vmem:[#allocation5 + $0xd8] sm:$0xff]
    %v173 = vld [vmem:[#allocation5 + $0xe0] sm:$0xff]
    %v174 = vld [vmem:[#allocation5 + $0xe8] sm:$0xff]
    %v175 = vld [vmem:[#allocation5 + $0xf0] sm:$0xff]
    %v176 = vld [vmem:[#allocation5 + $0xf8] sm:$0xff]
    %v177 = vld [vmem:[#allocation5 + $0x100] sm:$0xff]
    %v178 = vld [vmem:[#allocation5 + $0x108] sm:$0xff]
    %v179 = vld [vmem:[#allocation5 + $0x110] sm:$0xff]
    %v180 = vld [vmem:[#allocation5 + $0x118] sm:$0xff]
    %v181 = vld [vmem:[#allocation5 + $0x120] sm:$0xff]
    %v182 = vld [vmem:[#allocation5 + $0x128] sm:$0xff]
    %v183 = vld [vmem:[#allocation5 + $0x130] sm:$0xff]
    %v184 = vld [vmem:[#allocation5 + $0x138] sm:$0xff]
    %v185 = vld [vmem:[#allocation5 + $0x140] sm:$0xff]
    %v186 = vld [vmem:[#allocation5 + $0x148] sm:$0xff]
    %v187 = vld [vmem:[#allocation5 + $0x150] sm:$0xff]
    %v188 = vld [vmem:[#allocation5 + $0x158] sm:$0xff]
    %v189 = vld [vmem:[#allocation5 + $0x160] sm:$0xff]
    %v190 = vld [vmem:[#allocation5 + $0x168] sm:$0xff]
    %v191 = vld [vmem:[#allocation5 + $0x170] sm:$0xff]
    %v192 = vld [vmem:[#allocation5 + $0x178] sm:$0xff]
    %v193 = vld [vmem:[#allocation5 + $0x180] sm:$0xff]
    %v194 = vld [vmem:[#allocation5 + $0x188] sm:$0xff]
    %v195 = vld [vmem:[#allocation5 + $0x190] sm:$0xff]
    %v196 = vld [vmem:[#allocation5 + $0x198] sm:$0xff]
    %v197 = vld [vmem:[#allocation5 + $0x1a0] sm:$0xff]
    %v198 = vld [vmem:[#allocation5 + $0x1a8] sm:$0xff]
    %v199 = vld [vmem:[#allocation5 + $0x1b0] sm:$0xff]
    %v200 = vld [vmem:[#allocation5 + $0x1b8] sm:$0xff]
    %v201 = vld [vmem:[#allocation5 + $0x1c0] sm:$0xff]
    %v202 = vld [vmem:[#allocation5 + $0x1c8] sm:$0xff]
    %v203 = vld [vmem:[#allocation5 + $0x1d0] sm:$0xff]
    %v204 = vld [vmem:[#allocation5 + $0x1d8] sm:$0xff]
    %v205 = vld [vmem:[#allocation5 + $0x1e0] sm:$0xff]
    %v206 = vld [vmem:[#allocation5 + $0x1e8] sm:$0xff]
    %v207 = vld [vmem:[#allocation5 + $0x1f0] sm:$0xff]
    %v208 = vld [vmem:[#allocation5 + $0x1f8] sm:$0xff]
    %v209 = vld [vmem:[#allocation5 + $0x200] sm:$0xff]
    %v210 = vld [vmem:[#allocation5 + $0x208] sm:$0xff]
    %v211 = vld [vmem:[#allocation5 + $0x210] sm:$0xff]
    %v212 = vld [vmem:[#allocation5 + $0x218] sm:$0xff]
    %v213 = vld [vmem:[#allocation5 + $0x220] sm:$0xff]
    %v214 = vld [vmem:[#allocation5 + $0x228] sm:$0xff]
    %v215 = vld [vmem:[#allocation5 + $0x230] sm:$0xff]
    %v216 = vld [vmem:[#allocation5 + $0x238] sm:$0xff]
    %v217 = vld [vmem:[#allocation5 + $0x240] sm:$0xff]
    %v218 = vld [vmem:[#allocation5 + $0x248] sm:$0xff]
    %v219 = vld [vmem:[#allocation5 + $0x250] sm:$0xff]
    %v220 = vld [vmem:[#allocation5 + $0x258] sm:$0xff]
    %v221 = vld [vmem:[#allocation5 + $0x260] sm:$0xff]
    %v222 = vld [vmem:[#allocation5 + $0x268] sm:$0xff]
    %v223 = vld [vmem:[#allocation5 + $0x270] sm:$0xff]
    %v224 = vld [vmem:[#allocation5 + $0x278] sm:$0xff]
    %v225 = vld [vmem:[#allocation5 + $0x280] sm:$0xff]
    %v226 = vld [vmem:[#allocation5 + $0x288] sm:$0xff]
    %v227 = vld [vmem:[#allocation5 + $0x290] sm:$0xff]
    %v228 = vld [vmem:[#allocation5 + $0x298] sm:$0xff]
    %v229 = vld [vmem:[#allocation5 + $0x2a0] sm:$0xff]
    %v230 = vld [vmem:[#allocation5 + $0x2a8] sm:$0xff]
    %v231 = vld [vmem:[#allocation5 + $0x2b0] sm:$0xff]
    %v232 = vld [vmem:[#allocation5 + $0x2b8] sm:$0xff]
    %v233 = vld [vmem:[#allocation5 + $0x2c0] sm:$0xff]
    %v234 = vld [vmem:[#allocation5 + $0x2c8] sm:$0xff]
    %v235 = vld [vmem:[#allocation5 + $0x2d0] sm:$0xff]
    %v236 = vld [vmem:[#allocation5 + $0x2d8] sm:$0xff]
    %v237 = vld [vmem:[#allocation5 + $0x2e0] sm:$0xff]
    %v238 = vld [vmem:[#allocation5 + $0x2e8] sm:$0xff]
    %v239 = vld [vmem:[#allocation5 + $0x2f0] sm:$0xff]
    %v240 = vld [vmem:[#allocation5 + $0x2f8] sm:$0xff]
    %v241 = vld [vmem:[#allocation5 + $0x300] sm:$0xff]
    %v242 = vld [vmem:[#allocation5 + $0x308] sm:$0xff]
    %v243 = vld [vmem:[#allocation5 + $0x310] sm:$0xff]
    %v244 = vld [vmem:[#allocation5 + $0x318] sm:$0xff]
    %v245 = vld [vmem:[#allocation5 + $0x320] sm:$0xff]
    %v246 = vld [vmem:[#allocation5 + $0x328] sm:$0xff]
    %v247 = vld [vmem:[#allocation5 + $0x330] sm:$0xff]
    %v248 = vld [vmem:[#allocation5 + $0x338] sm:$0xff]
    %v249 = vld [vmem:[#allocation5 + $0x340] sm:$0xff]
    %v250 = vld [vmem:[#allocation5 + $0x348] sm:$0xff]
    %v251 = vld [vmem:[#allocation5 + $0x350] sm:$0xff]
    %v252 = vld [vmem:[#allocation5 + $0x358] sm:$0xff]
    %v253 = vld [vmem:[#allocation5 + $0x360] sm:$0xff]
    %v254 = vld [vmem:[#allocation5 + $0x368] sm:$0xff]
    %v255 = vld [vmem:[#allocation5 + $0x370] sm:$0xff]
    %v256 = vld [vmem:[#allocation5 + $0x378] sm:$0xff]
    %v257 = vld [vmem:[#allocation5 + $0x380] sm:$0xff]
    %v258 = vld [vmem:[#allocation5 + $0x388] sm:$0xff]
    %v259 = vld [vmem:[#allocation5 + $0x390] sm:$0xff]
    %v260 = vld [vmem:[#allocation5 + $0x398] sm:$0xff]
    %v261 = vld [vmem:[#allocation5 + $0x3a0] sm:$0xff]
    %v262 = vld [vmem:[#allocation5 + $0x3a8] sm:$0xff]
    %v263 = vld [vmem:[#allocation5 + $0x3b0] sm:$0xff]
    %v264 = vld [vmem:[#allocation5 + $0x3b8] sm:$0xff]
    %v265 = vld [vmem:[#allocation5 + $0x3c0] sm:$0xff]
    %v266 = vld [vmem:[#allocation5 + $0x3c8] sm:$0xff]
    %v267 = vld [vmem:[#allocation5 + $0x3d0] sm:$0xff]
    %v268 = vld [vmem:[#allocation5 + $0x3d8] sm:$0xff]
    %v269 = vld [vmem:[#allocation5 + $0x3e0] sm:$0xff]
    %v270 = vld [vmem:[#allocation5 + $0x3e8] sm:$0xff]
    %v271 = vld [vmem:[#allocation5 + $0x3f0] sm:$0xff]
    %v272 = vld [vmem:[#allocation5 + $0x3f8] sm:$0xff]
    %v273 = vld [vmem:[#allocation7] sm:$0x3]
    %v275 = vperm.slane %v273, 0
    %v276 = vperm.slane %v273, 1
    %280 = vst [vmem:[#allocation1] ss:$9 sm:$0xff] %v144
    %v281 = vld [vmem:[#allocation1] sm:$0xff]
    %v282 = vld [vmem:[#allocation1 + $0x9] sm:$0xff]
    %v283 = vld [vmem:[#allocation1 + $0x12] sm:$0xff]
    %v284 = vld [vmem:[#allocation1 + $0x1b] sm:$0xff]
    %v285 = vld [vmem:[#allocation1 + $0x24] sm:$0xff]
    %v286 = vld [vmem:[#allocation1 + $0x2d] sm:$0xff]
    %v287 = vld [vmem:[#allocation1 + $0x36] sm:$0xff]
    %v288 = vld [vmem:[#allocation1 + $0x3f] sm:$0xff]
    %v425 = vunpack.c.l.b16 %v145
    %v426 = vunpack.c.h.b16 %v145
    %v427 = vunpack.c.l.b16 %v146
    %v428 = vunpack.c.h.b16 %v146
    %v429 = vunpack.c.l.b16 %v147
    %v430 = vunpack.c.h.b16 %v147
    %v431 = vunpack.c.l.b16 %v148
    %v432 = vunpack.c.h.b16 %v148
    %v433 = vunpack.c.l.b16 %v149
    %v434 = vunpack.c.h.b16 %v149
    %v435 = vunpack.c.l.b16 %v150
    %v436 = vunpack.c.h.b16 %v150
    %v437 = vunpack.c.l.b16 %v151
    %v438 = vunpack.c.h.b16 %v151
    %v439 = vunpack.c.l.b16 %v152
    %v440 = vunpack.c.h.b16 %v152
    %v441 = vunpack.c.l.b16 %v153
    %v442 = vunpack.c.h.b16 %v153
    %v443 = vunpack.c.l.b16 %v154
    %v444 = vunpack.c.h.b16 %v154
    %v445 = vunpack.c.l.b16 %v155
    %v446 = vunpack.c.h.b16 %v155
    %v447 = vunpack.c.l.b16 %v156
    %v448 = vunpack.c.h.b16 %v156
    %v449 = vunpack.c.l.b16 %v157
    %v450 = vunpack.c.h.b16 %v157
    %v451 = vunpack.c.l.b16 %v158
    %v452 = vunpack.c.h.b16 %v158
    %v453 = vunpack.c.l.b16 %v159
    %v454 = vunpack.c.h.b16 %v159
    %v455 = vunpack.c.l.b16 %v160
    %v456 = vunpack.c.h.b16 %v160
    %v457 = vunpack.c.l.b16 %v161
    %v458 = vunpack.c.h.b16 %v161
    %v459 = vunpack.c.l.b16 %v162
    %v460 = vunpack.c.h.b16 %v162
    %v461 = vunpack.c.l.b16 %v163
    %v462 = vunpack.c.h.b16 %v163
    %v463 = vunpack.c.l.b16 %v164
    %v464 = vunpack.c.h.b16 %v164
    %v465 = vunpack.c.l.b16 %v165
    %v466 = vunpack.c.h.b16 %v165
    %v467 = vunpack.c.l.b16 %v166
    %v468 = vunpack.c.h.b16 %v166
    %v469 = vunpack.c.l.b16 %v167
    %v470 = vunpack.c.h.b16 %v167
    %v471 = vunpack.c.l.b16 %v168
    %v472 = vunpack.c.h.b16 %v168
    %v473 = vunpack.c.l.b16 %v169
    %v474 = vunpack.c.h.b16 %v169
    %v475 = vunpack.c.l.b16 %v170
    %v476 = vunpack.c.h.b16 %v170
    %v477 = vunpack.c.l.b16 %v171
    %v478 = vunpack.c.h.b16 %v171
    %v479 = vunpack.c.l.b16 %v172
    %v480 = vunpack.c.h.b16 %v172
    %v481 = vunpack.c.l.b16 %v173
    %v482 = vunpack.c.h.b16 %v173
    %v483 = vunpack.c.l.b16 %v174
    %v484 = vunpack.c.h.b16 %v174
    %v485 = vunpack.c.l.b16 %v175
    %v486 = vunpack.c.h.b16 %v175
    %v487 = vunpack.c.l.b16 %v176
    %v488 = vunpack.c.h.b16 %v176
    %v489 = vunpack.c.l.b16 %v177
    %v490 = vunpack.c.h.b16 %v177
    %v491 = vunpack.c.l.b16 %v178
    %v492 = vunpack.c.h.b16 %v178
    %v493 = vunpack.c.l.b16 %v179
    %v494 = vunpack.c.h.b16 %v179
    %v495 = vunpack.c.l.b16 %v180
    %v496 = vunpack.c.h.b16 %v180
    %v497 = vunpack.c.l.b16 %v181
    %v498 = vunpack.c.h.b16 %v181
    %v499 = vunpack.c.l.b16 %v182
    %v500 = vunpack.c.h.b16 %v182
    %v501 = vunpack.c.l.b16 %v183
    %v502 = vunpack.c.h.b16 %v183
    %v503 = vunpack.c.l.b16 %v184
    %v504 = vunpack.c.h.b16 %v184
    %v505 = vunpack.c.l.b16 %v185
    %v506 = vunpack.c.h.b16 %v185
    %v507 = vunpack.c.l.b16 %v186
    %v508 = vunpack.c.h.b16 %v186
    %v509 = vunpack.c.l.b16 %v187
    %v510 = vunpack.c.h.b16 %v187
    %v511 = vunpack.c.l.b16 %v188
    %v512 = vunpack.c.h.b16 %v188
    %v513 = vunpack.c.l.b16 %v189
    %v514 = vunpack.c.h.b16 %v189
    %v515 = vunpack.c.l.b16 %v190
    %v516 = vunpack.c.h.b16 %v190
    %v517 = vunpack.c.l.b16 %v191
    %v518 = vunpack.c.h.b16 %v191
    %v519 = vunpack.c.l.b16 %v192
    %v520 = vunpack.c.h.b16 %v192
    %v521 = vunpack.c.l.b16 %v193
    %v522 = vunpack.c.h.b16 %v193
    %v523 = vunpack.c.l.b16 %v194
    %v524 = vunpack.c.h.b16 %v194
    %v525 = vunpack.c.l.b16 %v195
    %v526 = vunpack.c.h.b16 %v195
    %v527 = vunpack.c.l.b16 %v196
    %v528 = vunpack.c.h.b16 %v196
    %v529 = vunpack.c.l.b16 %v197
    %v530 = vunpack.c.h.b16 %v197
    %v531 = vunpack.c.l.b16 %v198
    %v532 = vunpack.c.h.b16 %v198
    %v533 = vunpack.c.l.b16 %v199
    %v534 = vunpack.c.h.b16 %v199
    %v535 = vunpack.c.l.b16 %v200
    %v536 = vunpack.c.h.b16 %v200
    %v537 = vunpack.c.l.b16 %v201
    %v538 = vunpack.c.h.b16 %v201
    %v539 = vunpack.c.l.b16 %v202
    %v540 = vunpack.c.h.b16 %v202
    %v541 = vunpack.c.l.b16 %v203
    %v542 = vunpack.c.h.b16 %v203
    %v543 = vunpack.c.l.b16 %v204
    %v544 = vunpack.c.h.b16 %v204
    %v545 = vunpack.c.l.b16 %v205
    %v546 = vunpack.c.h.b16 %v205
    %v547 = vunpack.c.l.b16 %v206
    %v548 = vunpack.c.h.b16 %v206
    %v549 = vunpack.c.l.b16 %v207
    %v550 = vunpack.c.h.b16 %v207
    %v551 = vunpack.c.l.b16 %v208
    %v552 = vunpack.c.h.b16 %v208
    %v553 = vunpack.c.l.b16 %v209
    %v554 = vunpack.c.h.b16 %v209
    %v555 = vunpack.c.l.b16 %v210
    %v556 = vunpack.c.h.b16 %v210
    %v557 = vunpack.c.l.b16 %v211
    %v558 = vunpack.c.h.b16 %v211
    %v559 = vunpack.c.l.b16 %v212
    %v560 = vunpack.c.h.b16 %v212
    %v561 = vunpack.c.l.b16 %v213
    %v562 = vunpack.c.h.b16 %v213
    %v563 = vunpack.c.l.b16 %v214
    %v564 = vunpack.c.h.b16 %v214
    %v565 = vunpack.c.l.b16 %v215
    %v566 = vunpack.c.h.b16 %v215
    %v567 = vunpack.c.l.b16 %v216
    %v568 = vunpack.c.h.b16 %v216
    %v569 = vunpack.c.l.b16 %v217
    %v570 = vunpack.c.h.b16 %v217
    %v571 = vunpack.c.l.b16 %v218
    %v572 = vunpack.c.h.b16 %v218
    %v573 = vunpack.c.l.b16 %v219
    %v574 = vunpack.c.h.b16 %v219
    %v575 = vunpack.c.l.b16 %v220
    %v576 = vunpack.c.h.b16 %v220
    %v577 = vunpack.c.l.b16 %v221
    %v578 = vunpack.c.h.b16 %v221
    %v579 = vunpack.c.l.b16 %v222
    %v580 = vunpack.c.h.b16 %v222
    %v581 = vunpack.c.l.b16 %v223
    %v582 = vunpack.c.h.b16 %v223
    %v583 = vunpack.c.l.b16 %v224
    %v584 = vunpack.c.h.b16 %v224
    %v585 = vunpack.c.l.b16 %v225
    %v586 = vunpack.c.h.b16 %v225
    %v587 = vunpack.c.l.b16 %v226
    %v588 = vunpack.c.h.b16 %v226
    %v589 = vunpack.c.l.b16 %v227
    %v590 = vunpack.c.h.b16 %v227
    %v591 = vunpack.c.l.b16 %v228
    %v592 = vunpack.c.h.b16 %v228
    %v593 = vunpack.c.l.b16 %v229
    %v594 = vunpack.c.h.b16 %v229
    %v595 = vunpack.c.l.b16 %v230
    %v596 = vunpack.c.h.b16 %v230
    %v597 = vunpack.c.l.b16 %v231
    %v598 = vunpack.c.h.b16 %v231
    %v599 = vunpack.c.l.b16 %v232
    %v600 = vunpack.c.h.b16 %v232
    %v601 = vunpack.c.l.b16 %v233
    %v602 = vunpack.c.h.b16 %v233
    %v603 = vunpack.c.l.b16 %v234
    %v604 = vunpack.c.h.b16 %v234
    %v605 = vunpack.c.l.b16 %v235
    %v606 = vunpack.c.h.b16 %v235
    %v607 = vunpack.c.l.b16 %v236
    %v608 = vunpack.c.h.b16 %v236
    %v609 = vunpack.c.l.b16 %v237
    %v610 = vunpack.c.h.b16 %v237
    %v611 = vunpack.c.l.b16 %v238
    %v612 = vunpack.c.h.b16 %v238
    %v613 = vunpack.c.l.b16 %v239
    %v614 = vunpack.c.h.b16 %v239
    %v615 = vunpack.c.l.b16 %v240
    %v616 = vunpack.c.h.b16 %v240
    %v617 = vunpack.c.l.b16 %v241
    %v618 = vunpack.c.h.b16 %v241
    %v619 = vunpack.c.l.b16 %v242
    %v620 = vunpack.c.h.b16 %v242
    %v621 = vunpack.c.l.b16 %v243
    %v622 = vunpack.c.h.b16 %v243
    %v623 = vunpack.c.l.b16 %v244
    %v624 = vunpack.c.h.b16 %v244
    %v625 = vunpack.c.l.b16 %v245
    %v626 = vunpack.c.h.b16 %v245
    %v627 = vunpack.c.l.b16 %v246
    %v628 = vunpack.c.h.b16 %v246
    %v629 = vunpack.c.l.b16 %v247
    %v630 = vunpack.c.h.b16 %v247
    %v631 = vunpack.c.l.b16 %v248
    %v632 = vunpack.c.h.b16 %v248
    %v633 = vunpack.c.l.b16 %v249
    %v634 = vunpack.c.h.b16 %v249
    %v635 = vunpack.c.l.b16 %v250
    %v636 = vunpack.c.h.b16 %v250
    %v637 = vunpack.c.l.b16 %v251
    %v638 = vunpack.c.h.b16 %v251
    %v639 = vunpack.c.l.b16 %v252
    %v640 = vunpack.c.h.b16 %v252
    %v641 = vunpack.c.l.b16 %v253
    %v642 = vunpack.c.h.b16 %v253
    %v643 = vunpack.c.l.b16 %v254
    %v644 = vunpack.c.h.b16 %v254
    %v645 = vunpack.c.l.b16 %v255
    %v646 = vunpack.c.h.b16 %v255
    %v647 = vunpack.c.l.b16 %v256
    %v648 = vunpack.c.h.b16 %v256
    %v649 = vunpack.c.l.b16 %v257
    %v650 = vunpack.c.h.b16 %v257
    %v651 = vunpack.c.l.b16 %v258
    %v652 = vunpack.c.h.b16 %v258
    %v653 = vunpack.c.l.b16 %v259
    %v654 = vunpack.c.h.b16 %v259
    %v655 = vunpack.c.l.b16 %v260
    %v656 = vunpack.c.h.b16 %v260
    %v657 = vunpack.c.l.b16 %v261
    %v658 = vunpack.c.h.b16 %v261
    %v659 = vunpack.c.l.b16 %v262
    %v660 = vunpack.c.h.b16 %v262
    %v661 = vunpack.c.l.b16 %v263
    %v662 = vunpack.c.h.b16 %v263
    %v663 = vunpack.c.l.b16 %v264
    %v664 = vunpack.c.h.b16 %v264
    %v665 = vunpack.c.l.b16 %v265
    %v666 = vunpack.c.h.b16 %v265
    %v667 = vunpack.c.l.b16 %v266
    %v668 = vunpack.c.h.b16 %v266
    %v669 = vunpack.c.l.b16 %v267
    %v670 = vunpack.c.h.b16 %v267
    %v671 = vunpack.c.l.b16 %v268
    %v672 = vunpack.c.h.b16 %v268
    %v673 = vunpack.c.l.b16 %v269
    %v674 = vunpack.c.h.b16 %v269
    %v675 = vunpack.c.l.b16 %v270
    %v676 = vunpack.c.h.b16 %v270
    %v677 = vunpack.c.l.b16 %v271
    %v678 = vunpack.c.h.b16 %v271
    %v679 = vunpack.c.l.b16 %v272
    %v680 = vunpack.c.h.b16 %v272
    %v681 = vpack.c.b16 %v427, %v425
    %v682 = vpack.c.b16 %v428, %v426
    %v683 = vpack.c.b16 %v431, %v429
    %v684 = vpack.c.b16 %v432, %v430
    %v685 = vpack.c.b16 %v435, %v433
    %v686 = vpack.c.b16 %v436, %v434
    %v687 = vpack.c.b16 %v439, %v437
    %v688 = vpack.c.b16 %v440, %v438
    %v689 = vpack.c.b16 %v443, %v441
    %v690 = vpack.c.b16 %v444, %v442
    %v691 = vpack.c.b16 %v447, %v445
    %v692 = vpack.c.b16 %v448, %v446
    %v693 = vpack.c.b16 %v451, %v449
    %v694 = vpack.c.b16 %v452, %v450
    %v695 = vpack.c.b16 %v455, %v453
    %v696 = vpack.c.b16 %v456, %v454
    %v697 = vpack.c.b16 %v459, %v457
    %v698 = vpack.c.b16 %v460, %v458
    %v699 = vpack.c.b16 %v463, %v461
    %v700 = vpack.c.b16 %v464, %v462
    %v701 = vpack.c.b16 %v467, %v465
    %v702 = vpack.c.b16 %v468, %v466
    %v703 = vpack.c.b16 %v471, %v469
    %v704 = vpack.c.b16 %v472, %v470
    %v705 = vpack.c.b16 %v475, %v473
    %v706 = vpack.c.b16 %v476, %v474
    %v707 = vpack.c.b16 %v479, %v477
    %v708 = vpack.c.b16 %v480, %v478
    %v709 = vpack.c.b16 %v483, %v481
    %v710 = vpack.c.b16 %v484, %v482
    %v711 = vpack.c.b16 %v487, %v485
    %v712 = vpack.c.b16 %v488, %v486
    %v713 = vpack.c.b16 %v491, %v489
    %v714 = vpack.c.b16 %v492, %v490
    %v715 = vpack.c.b16 %v495, %v493
    %v716 = vpack.c.b16 %v496, %v494
    %v717 = vpack.c.b16 %v499, %v497
    %v718 = vpack.c.b16 %v500, %v498
    %v719 = vpack.c.b16 %v503, %v501
    %v720 = vpack.c.b16 %v504, %v502
    %v721 = vpack.c.b16 %v507, %v505
    %v722 = vpack.c.b16 %v508, %v506
    %v723 = vpack.c.b16 %v511, %v509
    %v724 = vpack.c.b16 %v512, %v510
    %v725 = vpack.c.b16 %v515, %v513
    %v726 = vpack.c.b16 %v516, %v514
    %v727 = vpack.c.b16 %v519, %v517
    %v728 = vpack.c.b16 %v520, %v518
    %v729 = vpack.c.b16 %v523, %v521
    %v730 = vpack.c.b16 %v524, %v522
    %v731 = vpack.c.b16 %v527, %v525
    %v732 = vpack.c.b16 %v528, %v526
    %v733 = vpack.c.b16 %v531, %v529
    %v734 = vpack.c.b16 %v532, %v530
    %v735 = vpack.c.b16 %v535, %v533
    %v736 = vpack.c.b16 %v536, %v534
    %v737 = vpack.c.b16 %v539, %v537
    %v738 = vpack.c.b16 %v540, %v538
    %v739 = vpack.c.b16 %v543, %v541
    %v740 = vpack.c.b16 %v544, %v542
    %v741 = vpack.c.b16 %v547, %v545
    %v742 = vpack.c.b16 %v548, %v546
    %v743 = vpack.c.b16 %v551, %v549
    %v744 = vpack.c.b16 %v552, %v550
    %v745 = vpack.c.b16 %v555, %v553
    %v746 = vpack.c.b16 %v556, %v554
    %v747 = vpack.c.b16 %v559, %v557
    %v748 = vpack.c.b16 %v560, %v558
    %v749 = vpack.c.b16 %v563, %v561
    %v750 = vpack.c.b16 %v564, %v562
    %v751 = vpack.c.b16 %v567, %v565
    %v752 = vpack.c.b16 %v568, %v566
    %v753 = vpack.c.b16 %v571, %v569
    %v754 = vpack.c.b16 %v572, %v570
    %v755 = vpack.c.b16 %v575, %v573
    %v756 = vpack.c.b16 %v576, %v574
    %v757 = vpack.c.b16 %v579, %v577
    %v758 = vpack.c.b16 %v580, %v578
    %v759 = vpack.c.b16 %v583, %v581
    %v760 = vpack.c.b16 %v584, %v582
    %v761 = vpack.c.b16 %v587, %v585
    %v762 = vpack.c.b16 %v588, %v586
    %v763 = vpack.c.b16 %v591, %v589
    %v764 = vpack.c.b16 %v592, %v590
    %v765 = vpack.c.b16 %v595, %v593
    %v766 = vpack.c.b16 %v596, %v594
    %v767 = vpack.c.b16 %v599, %v597
    %v768 = vpack.c.b16 %v600, %v598
    %v769 = vpack.c.b16 %v603, %v601
    %v770 = vpack.c.b16 %v604, %v602
    %v771 = vpack.c.b16 %v607, %v605
    %v772 = vpack.c.b16 %v608, %v606
    %v773 = vpack.c.b16 %v611, %v609
    %v774 = vpack.c.b16 %v612, %v610
    %v775 = vpack.c.b16 %v615, %v613
    %v776 = vpack.c.b16 %v616, %v614
    %v777 = vpack.c.b16 %v619, %v617
    %v778 = vpack.c.b16 %v620, %v618
    %v779 = vpack.c.b16 %v623, %v621
    %v780 = vpack.c.b16 %v624, %v622
    %v781 = vpack.c.b16 %v627, %v625
    %v782 = vpack.c.b16 %v628, %v626
    %v783 = vpack.c.b16 %v631, %v629
    %v784 = vpack.c.b16 %v632, %v630
    %v785 = vpack.c.b16 %v635, %v633
    %v786 = vpack.c.b16 %v636, %v634
    %v787 = vpack.c.b16 %v639, %v637
    %v788 = vpack.c.b16 %v640, %v638
    %v789 = vpack.c.b16 %v643, %v641
    %v790 = vpack.c.b16 %v644, %v642
    %v791 = vpack.c.b16 %v647, %v645
    %v792 = vpack.c.b16 %v648, %v646
    %v793 = vpack.c.b16 %v651, %v649
    %v794 = vpack.c.b16 %v652, %v650
    %v795 = vpack.c.b16 %v655, %v653
    %v796 = vpack.c.b16 %v656, %v654
    %v797 = vpack.c.b16 %v659, %v657
    %v798 = vpack.c.b16 %v660, %v658
    %v799 = vpack.c.b16 %v663, %v661
    %v800 = vpack.c.b16 %v664, %v662
    %v801 = vpack.c.b16 %v667, %v665
    %v802 = vpack.c.b16 %v668, %v666
    %v803 = vpack.c.b16 %v671, %v669
    %v804 = vpack.c.b16 %v672, %v670
    %v805 = vpack.c.b16 %v675, %v673
    %v806 = vpack.c.b16 %v676, %v674
    %v807 = vpack.c.b16 %v679, %v677
    %v808 = vpack.c.b16 %v680, %v678
    %937 = vmatpush.bf16.msra.mxu0 %v695
    %938 = vmatpush.bf16.msra.mxu0 %v693
    %939 = vmatpush.bf16.msra.mxu0 %v691
    %940 = vmatpush.bf16.msra.mxu0 %v689
    %941 = vmatpush.bf16.msra.mxu0 %v687
    %942 = vmatpush.bf16.msra.mxu0 %v685
    %943 = vmatpush.bf16.msra.mxu0 %v683
    %944 = vmatpush.bf16.msra.mxu0 %v681
    %945 = vmatmul.bf16.gmra.mxu0 %v281
    %v946 = vpop.f32.mrf.mxu0
    %v947 = vadd.f32 %v275, %v946
    %v948 = vpop.f32.mrf.mxu0
    %949 = vdwg.mxu0
    %950 = vmatpush.bf16.msra.mxu0 %v711
    %951 = vmatpush.bf16.msra.mxu0 %v709
    %952 = vmatpush.bf16.msra.mxu0 %v707
    %953 = vmatpush.bf16.msra.mxu0 %v705
    %954 = vmatpush.bf16.msra.mxu0 %v703
    %955 = vmatpush.bf16.msra.mxu0 %v701
    %956 = vmatpush.bf16.msra.mxu0 %v699
    %957 = vmatpush.bf16.msra.mxu0 %v697
    %958 = vmatmul.bf16.gmra.mxu0 %v282
    %v959 = vpop.f32.mrf.mxu0
    %v960 = vadd.f32 %v947, %v959
    %v961 = vpop.f32.mrf.mxu0
    %962 = vdwg.mxu0
    %963 = vmatpush.bf16.msra.mxu0 %v727
    %964 = vmatpush.bf16.msra.mxu0 %v725
    %965 = vmatpush.bf16.msra.mxu0 %v723
    %966 = vmatpush.bf16.msra.mxu0 %v721
    %967 = vmatpush.bf16.msra.mxu0 %v719
    %968 = vmatpush.bf16.msra.mxu0 %v717
    %969 = vmatpush.bf16.msra.mxu0 %v715
    %970 = vmatpush.bf16.msra.mxu0 %v713
    %971 = vmatmul.bf16.gmra.mxu0 %v283
    %v972 = vpop.f32.mrf.mxu0
    %v973 = vadd.f32 %v960, %v972
    %v974 = vpop.f32.mrf.mxu0
    %975 = vdwg.mxu0
    %976 = vmatpush.bf16.msra.mxu0 %v743
    %977 = vmatpush.bf16.msra.mxu0 %v741
    %978 = vmatpush.bf16.msra.mxu0 %v739
    %979 = vmatpush.bf16.msra.mxu0 %v737
    %980 = vmatpush.bf16.msra.mxu0 %v735
    %981 = vmatpush.bf16.msra.mxu0 %v733
    %982 = vmatpush.bf16.msra.mxu0 %v731
    %983 = vmatpush.bf16.msra.mxu0 %v729
    %984 = vmatmul.bf16.gmra.mxu0 %v284
    %v985 = vpop.f32.mrf.mxu0
    %v986 = vadd.f32 %v973, %v985
    %v987 = vpop.f32.mrf.mxu0
    %988 = vdwg.mxu0
    %989 = vmatpush.bf16.msra.mxu0 %v759
    %990 = vmatpush.bf16.msra.mxu0 %v757
    %991 = vmatpush.bf16.msra.mxu0 %v755
    %992 = vmatpush.bf16.msra.mxu0 %v753
    %993 = vmatpush.bf16.msra.mxu0 %v751
    %994 = vmatpush.bf16.msra.mxu0 %v749
    %995 = vmatpush.bf16.msra.mxu0 %v747
    %996 = vmatpush.bf16.msra.mxu0 %v745
    %997 = vmatmul.bf16.gmra.mxu0 %v285
    %v998 = vpop.f32.mrf.mxu0
    %v999 = vadd.f32 %v986, %v998
    %v1000 = vpop.f32.mrf.mxu0
    %1001 = vdwg.mxu0
    %1002 = vmatpush.bf16.msra.mxu0 %v775
    %1003 = vmatpush.bf16.msra.mxu0 %v773
    %1004 = vmatpush.bf16.msra.mxu0 %v771
    %1005 = vmatpush.bf16.msra.mxu0 %v769
    %1006 = vmatpush.bf16.msra.mxu0 %v767
    %1007 = vmatpush.bf16.msra.mxu0 %v765
    %1008 = vmatpush.bf16.msra.mxu0 %v763
    %1009 = vmatpush.bf16.msra.mxu0 %v761
    %1010 = vmatmul.bf16.gmra.mxu0 %v286
    %v1011 = vpop.f32.mrf.mxu0
    %v1012 = vadd.f32 %v999, %v1011
    %v1013 = vpop.f32.mrf.mxu0
    %1014 = vdwg.mxu0
    %1015 = vmatpush.bf16.msra.mxu0 %v791
    %1016 = vmatpush.bf16.msra.mxu0 %v789
    %1017 = vmatpush.bf16.msra.mxu0 %v787
    %1018 = vmatpush.bf16.msra.mxu0 %v785
    %1019 = vmatpush.bf16.msra.mxu0 %v783
    %1020 = vmatpush.bf16.msra.mxu0 %v781
    %1021 = vmatpush.bf16.msra.mxu0 %v779
    %1022 = vmatpush.bf16.msra.mxu0 %v777
    %1023 = vmatmul.bf16.gmra.mxu0 %v287
    %v1024 = vpop.f32.mrf.mxu0
    %v1025 = vadd.f32 %v1012, %v1024
    %v1026 = vpop.f32.mrf.mxu0
    %1027 = vdwg.mxu0
    %1028 = vmatpush.bf16.msra.mxu0 %v807
    %1029 = vmatpush.bf16.msra.mxu0 %v805
    %1030 = vmatpush.bf16.msra.mxu0 %v803
    %1031 = vmatpush.bf16.msra.mxu0 %v801
    %1032 = vmatpush.bf16.msra.mxu0 %v799
    %1033 = vmatpush.bf16.msra.mxu0 %v797
    %1034 = vmatpush.bf16.msra.mxu0 %v795
    %1035 = vmatpush.bf16.msra.mxu0 %v793
    %1036 = vmatmul.bf16.gmra.mxu0 %v288
    %v1037 = vpop.f32.mrf.mxu0
    %v1038 = vadd.f32 %v1025, %v1037
    %v1039 = vpop.f32.mrf.mxu0
    %1040 = vdwg.mxu0
    %1041 = vmatpush.bf16.msra.mxu0 %v696
    %1042 = vmatpush.bf16.msra.mxu0 %v694
    %1043 = vmatpush.bf16.msra.mxu0 %v692
    %1044 = vmatpush.bf16.msra.mxu0 %v690
    %1045 = vmatpush.bf16.msra.mxu0 %v688
    %1046 = vmatpush.bf16.msra.mxu0 %v686
    %1047 = vmatpush.bf16.msra.mxu0 %v684
    %1048 = vmatpush.bf16.msra.mxu0 %v682
    %1049 = vmatmul.bf16.gmra.mxu0 %v281
    %v1050 = vpop.f32.mrf.mxu0
    %v1051 = vadd.f32 %v276, %v1050
    %v1052 = vpop.f32.mrf.mxu0
    %1053 = vdwg.mxu0
    %1054 = vmatpush.bf16.msra.mxu0 %v712
    %1055 = vmatpush.bf16.msra.mxu0 %v710
    %1056 = vmatpush.bf16.msra.mxu0 %v708
    %1057 = vmatpush.bf16.msra.mxu0 %v706
    %1058 = vmatpush.bf16.msra.mxu0 %v704
    %1059 = vmatpush.bf16.msra.mxu0 %v702
    %1060 = vmatpush.bf16.msra.mxu0 %v700
    %1061 = vmatpush.bf16.msra.mxu0 %v698
    %1062 = vmatmul.bf16.gmra.mxu0 %v282
    %v1063 = vpop.f32.mrf.mxu0
    %v1064 = vadd.f32 %v1051, %v1063
    %v1065 = vpop.f32.mrf.mxu0
    %1066 = vdwg.mxu0
    %1067 = vmatpush.bf16.msra.mxu0 %v728
    %1068 = vmatpush.bf16.msra.mxu0 %v726
    %1069 = vmatpush.bf16.msra.mxu0 %v724
    %1070 = vmatpush.bf16.msra.mxu0 %v722
    %1071 = vmatpush.bf16.msra.mxu0 %v720
    %1072 = vmatpush.bf16.msra.mxu0 %v718
    %1073 = vmatpush.bf16.msra.mxu0 %v716
    %1074 = vmatpush.bf16.msra.mxu0 %v714
    %1075 = vmatmul.bf16.gmra.mxu0 %v283
    %v1076 = vpop.f32.mrf.mxu0
    %v1077 = vadd.f32 %v1064, %v1076
    %v1078 = vpop.f32.mrf.mxu0
    %1079 = vdwg.mxu0
    %1080 = vmatpush.bf16.msra.mxu0 %v744
    %1081 = vmatpush.bf16.msra.mxu0 %v742
    %1082 = vmatpush.bf16.msra.mxu0 %v740
    %1083 = vmatpush.bf16.msra.mxu0 %v738
    %1084 = vmatpush.bf16.msra.mxu0 %v736
    %1085 = vmatpush.bf16.msra.mxu0 %v734
    %1086 = vmatpush.bf16.msra.mxu0 %v732
    %1087 = vmatpush.bf16.msra.mxu0 %v730
    %1088 = vmatmul.bf16.gmra.mxu0 %v284
    %v1089 = vpop.f32.mrf.mxu0
    %v1090 = vadd.f32 %v1077, %v1089
    %v1091 = vpop.f32.mrf.mxu0
    %1092 = vdwg.mxu0
    %1093 = vmatpush.bf16.msra.mxu0 %v760
    %1094 = vmatpush.bf16.msra.mxu0 %v758
    %1095 = vmatpush.bf16.msra.mxu0 %v756
    %1096 = vmatpush.bf16.msra.mxu0 %v754
    %1097 = vmatpush.bf16.msra.mxu0 %v752
    %1098 = vmatpush.bf16.msra.mxu0 %v750
    %1099 = vmatpush.bf16.msra.mxu0 %v748
    %1100 = vmatpush.bf16.msra.mxu0 %v746
    %1101 = vmatmul.bf16.gmra.mxu0 %v285
    %v1102 = vpop.f32.mrf.mxu0
    %v1103 = vadd.f32 %v1090, %v1102
    %v1104 = vpop.f32.mrf.mxu0
    %1105 = vdwg.mxu0
    %1106 = vmatpush.bf16.msra.mxu0 %v776
    %1107 = vmatpush.bf16.msra.mxu0 %v774
    %1108 = vmatpush.bf16.msra.mxu0 %v772
    %1109 = vmatpush.bf16.msra.mxu0 %v770
    %1110 = vmatpush.bf16.msra.mxu0 %v768
    %1111 = vmatpush.bf16.msra.mxu0 %v766
    %1112 = vmatpush.bf16.msra.mxu0 %v764
    %1113 = vmatpush.bf16.msra.mxu0 %v762
    %1114 = vmatmul.bf16.gmra.mxu0 %v286
    %v1115 = vpop.f32.mrf.mxu0
    %v1116 = vadd.f32 %v1103, %v1115
    %v1117 = vpop.f32.mrf.mxu0
    %1118 = vdwg.mxu0
    %1119 = vmatpush.bf16.msra.mxu0 %v792
    %1120 = vmatpush.bf16.msra.mxu0 %v790
    %1121 = vmatpush.bf16.msra.mxu0 %v788
    %1122 = vmatpush.bf16.msra.mxu0 %v786
    %1123 = vmatpush.bf16.msra.mxu0 %v784
    %1124 = vmatpush.bf16.msra.mxu0 %v782
    %1125 = vmatpush.bf16.msra.mxu0 %v780
    %1126 = vmatpush.bf16.msra.mxu0 %v778
    %1127 = vmatmul.bf16.gmra.mxu0 %v287
    %v1128 = vpop.f32.mrf.mxu0
    %v1129 = vadd.f32 %v1116, %v1128
    %v1130 = vpop.f32.mrf.mxu0
    %1131 = vdwg.mxu0
    %1132 = vmatpush.bf16.msra.mxu0 %v808
    %1133 = vmatpush.bf16.msra.mxu0 %v806
    %1134 = vmatpush.bf16.msra.mxu0 %v804
    %1135 = vmatpush.bf16.msra.mxu0 %v802
    %1136 = vmatpush.bf16.msra.mxu0 %v800
    %1137 = vmatpush.bf16.msra.mxu0 %v798
    %1138 = vmatpush.bf16.msra.mxu0 %v796
    %1139 = vmatpush.bf16.msra.mxu0 %v794
    %1140 = vmatmul.bf16.gmra.mxu0 %v288
    %v1141 = vpop.f32.mrf.mxu0
    %v1142 = vadd.f32 %v1129, %v1141
    %v1143 = vpop.f32.mrf.mxu0
    %1144 = vdwg.mxu0
    %v1145 = vmax.f32 %v1038, 0.0
    %v1146 = vmax.f32 %v1142, 0.0
    %v1147 = vpack.c.bf16 %v1145, %v1145
    %v1148 = vpack.c.bf16 %v1146, %v1146
    %v1149 = vld [vmem:[#allocation8] sm:$0xff]
    %v1150 = vld [vmem:[#allocation8 + $0x8] sm:$0xff]
    %v1151 = vld [vmem:[#allocation8 + $0x10] sm:$0xff]
    %v1152 = vld [vmem:[#allocation8 + $0x18] sm:$0xff]
    %v1153 = vld [vmem:[#allocation8 + $0x20] sm:$0xff]
    %v1154 = vld [vmem:[#allocation8 + $0x28] sm:$0xff]
    %v1155 = vld [vmem:[#allocation8 + $0x30] sm:$0xff]
    %v1156 = vld [vmem:[#allocation8 + $0x38] sm:$0xff]
    %v1157 = vld [vmem:[#allocation8 + $0x40] sm:$0xff]
    %v1158 = vld [vmem:[#allocation8 + $0x48] sm:$0xff]
    %v1159 = vld [vmem:[#allocation8 + $0x50] sm:$0xff]
    %v1160 = vld [vmem:[#allocation8 + $0x58] sm:$0xff]
    %v1161 = vld [vmem:[#allocation8 + $0x60] sm:$0xff]
    %v1162 = vld [vmem:[#allocation8 + $0x68] sm:$0xff]
    %v1163 = vld [vmem:[#allocation8 + $0x70] sm:$0xff]
    %v1164 = vld [vmem:[#allocation8 + $0x78] sm:$0xff]
    %v1165 = vld [vmem:[#allocation8 + $0x80] sm:$0xff]
    %v1166 = vld [vmem:[#allocation8 + $0x88] sm:$0xff]
    %v1167 = vld [vmem:[#allocation8 + $0x90] sm:$0xff]
    %v1168 = vld [vmem:[#allocation8 + $0x98] sm:$0xff]
    %v1169 = vld [vmem:[#allocation8 + $0xa0] sm:$0xff]
    %v1170 = vld [vmem:[#allocation8 + $0xa8] sm:$0xff]
    %v1171 = vld [vmem:[#allocation8 + $0xb0] sm:$0xff]
    %v1172 = vld [vmem:[#allocation8 + $0xb8] sm:$0xff]
    %v1173 = vld [vmem:[#allocation8 + $0xc0] sm:$0xff]
    %v1174 = vld [vmem:[#allocation8 + $0xc8] sm:$0xff]
    %v1175 = vld [vmem:[#allocation8 + $0xd0] sm:$0xff]
    %v1176 = vld [vmem:[#allocation8 + $0xd8] sm:$0xff]
    %v1177 = vld [vmem:[#allocation8 + $0xe0] sm:$0xff]
    %v1178 = vld [vmem:[#allocation8 + $0xe8] sm:$0xff]
    %v1179 = vld [vmem:[#allocation8 + $0xf0] sm:$0xff]
    %v1180 = vld [vmem:[#allocation8 + $0xf8] sm:$0xff]
    %v1181 = vld [vmem:[%s4] sm:$0x3]
    %v1183 = vperm.slane %v1181, 0
    %v1184 = vperm.slane %v1181, 1
    %v1219 = vunpack.c.l.b16 %v1149
    %v1220 = vunpack.c.h.b16 %v1149
    %v1221 = vunpack.c.l.b16 %v1150
    %v1222 = vunpack.c.h.b16 %v1150
    %v1223 = vunpack.c.l.b16 %v1151
    %v1224 = vunpack.c.h.b16 %v1151
    %v1225 = vunpack.c.l.b16 %v1152
    %v1226 = vunpack.c.h.b16 %v1152
    %v1227 = vunpack.c.l.b16 %v1153
    %v1228 = vunpack.c.h.b16 %v1153
    %v1229 = vunpack.c.l.b16 %v1154
    %v1230 = vunpack.c.h.b16 %v1154
    %v1231 = vunpack.c.l.b16 %v1155
    %v1232 = vunpack.c.h.b16 %v1155
    %v1233 = vunpack.c.l.b16 %v1156
    %v1234 = vunpack.c.h.b16 %v1156
    %v1235 = vunpack.c.l.b16 %v1157
    %v1236 = vunpack.c.h.b16 %v1157
    %v1237 = vunpack.c.l.b16 %v1158
    %v1238 = vunpack.c.h.b16 %v1158
    %v1239 = vunpack.c.l.b16 %v1159
    %v1240 = vunpack.c.h.b16 %v1159
    %v1241 = vunpack.c.l.b16 %v1160
    %v1242 = vunpack.c.h.b16 %v1160
    %v1243 = vunpack.c.l.b16 %v1161
    %v1244 = vunpack.c.h.b16 %v1161
    %v1245 = vunpack.c.l.b16 %v1162
    %v1246 = vunpack.c.h.b16 %v1162
    %v1247 = vunpack.c.l.b16 %v1163
    %v1248 = vunpack.c.h.b16 %v1163
    %v1249 = vunpack.c.l.b16 %v1164
    %v1250 = vunpack.c.h.b16 %v1164
    %v1251 = vunpack.c.l.b16 %v1165
    %v1252 = vunpack.c.h.b16 %v1165
    %v1253 = vunpack.c.l.b16 %v1166
    %v1254 = vunpack.c.h.b16 %v1166
    %v1255 = vunpack.c.l.b16 %v1167
    %v1256 = vunpack.c.h.b16 %v1167
    %v1257 = vunpack.c.l.b16 %v1168
    %v1258 = vunpack.c.h.b16 %v1168
    %v1259 = vunpack.c.l.b16 %v1169
    %v1260 = vunpack.c.h.b16 %v1169
    %v1261 = vunpack.c.l.b16 %v1170
    %v1262 = vunpack.c.h.b16 %v1170
    %v1263 = vunpack.c.l.b16 %v1171
    %v1264 = vunpack.c.h.b16 %v1171
    %v1265 = vunpack.c.l.b16 %v1172
    %v1266 = vunpack.c.h.b16 %v1172
    %v1267 = vunpack.c.l.b16 %v1173
    %v1268 = vunpack.c.h.b16 %v1173
    %v1269 = vunpack.c.l.b16 %v1174
    %v1270 = vunpack.c.h.b16 %v1174
    %v1271 = vunpack.c.l.b16 %v1175
    %v1272 = vunpack.c.h.b16 %v1175
    %v1273 = vunpack.c.l.b16 %v1176
    %v1274 = vunpack.c.h.b16 %v1176
    %v1275 = vunpack.c.l.b16 %v1177
    %v1276 = vunpack.c.h.b16 %v1177
    %v1277 = vunpack.c.l.b16 %v1178
    %v1278 = vunpack.c.h.b16 %v1178
    %v1279 = vunpack.c.l.b16 %v1179
    %v1280 = vunpack.c.h.b16 %v1179
    %v1281 = vunpack.c.l.b16 %v1180
    %v1282 = vunpack.c.h.b16 %v1180
    %v1283 = vpack.c.b16 %v1221, %v1219
    %v1284 = vpack.c.b16 %v1222, %v1220
    %v1285 = vpack.c.b16 %v1225, %v1223
    %v1286 = vpack.c.b16 %v1226, %v1224
    %v1287 = vpack.c.b16 %v1229, %v1227
    %v1288 = vpack.c.b16 %v1230, %v1228
    %v1289 = vpack.c.b16 %v1233, %v1231
    %v1290 = vpack.c.b16 %v1234, %v1232
    %v1291 = vpack.c.b16 %v1237, %v1235
    %v1292 = vpack.c.b16 %v1238, %v1236
    %v1293 = vpack.c.b16 %v1241, %v1239
    %v1294 = vpack.c.b16 %v1242, %v1240
    %v1295 = vpack.c.b16 %v1245, %v1243
    %v1296 = vpack.c.b16 %v1246, %v1244
    %v1297 = vpack.c.b16 %v1249, %v1247
    %v1298 = vpack.c.b16 %v1250, %v1248
    %v1299 = vpack.c.b16 %v1253, %v1251
    %v1300 = vpack.c.b16 %v1254, %v1252
    %v1301 = vpack.c.b16 %v1257, %v1255
    %v1302 = vpack.c.b16 %v1258, %v1256
    %v1303 = vpack.c.b16 %v1261, %v1259
    %v1304 = vpack.c.b16 %v1262, %v1260
    %v1305 = vpack.c.b16 %v1265, %v1263
    %v1306 = vpack.c.b16 %v1266, %v1264
    %v1307 = vpack.c.b16 %v1269, %v1267
    %v1308 = vpack.c.b16 %v1270, %v1268
    %v1309 = vpack.c.b16 %v1273, %v1271
    %v1310 = vpack.c.b16 %v1274, %v1272
    %v1311 = vpack.c.b16 %v1277, %v1275
    %v1312 = vpack.c.b16 %v1278, %v1276
    %v1313 = vpack.c.b16 %v1281, %v1279
    %v1314 = vpack.c.b16 %v1282, %v1280
    %1347 = vmatpush.bf16.msra.mxu0 %v1297
    %1348 = vmatpush.bf16.msra.mxu0 %v1295
    %1349 = vmatpush.bf16.msra.mxu0 %v1293
    %1350 = vmatpush.bf16.msra.mxu0 %v1291
    %1351 = vmatpush.bf16.msra.mxu0 %v1289
    %1352 = vmatpush.bf16.msra.mxu0 %v1287
    %1353 = vmatpush.bf16.msra.mxu0 %v1285
    %1354 = vmatpush.bf16.msra.mxu0 %v1283
    %1355 = vmatmul.bf16.gmra.mxu0 %v1147
    %v1356 = vpop.f32.mrf.mxu0
    %v1357 = vadd.f32 %v1183, %v1356
    %v1358 = vpop.f32.mrf.mxu0
    %1359 = vdwg.mxu0
    %1360 = vmatpush.bf16.msra.mxu0 %v1313
    %1361 = vmatpush.bf16.msra.mxu0 %v1311
    %1362 = vmatpush.bf16.msra.mxu0 %v1309
    %1363 = vmatpush.bf16.msra.mxu0 %v1307
    %1364 = vmatpush.bf16.msra.mxu0 %v1305
    %1365 = vmatpush.bf16.msra.mxu0 %v1303
    %1366 = vmatpush.bf16.msra.mxu0 %v1301
    %1367 = vmatpush.bf16.msra.mxu0 %v1299
    %1368 = vmatmul.bf16.gmra.mxu0 %v1148
    %v1369 = vpop.f32.mrf.mxu0
    %v1370 = vadd.f32 %v1357, %v1369
    %v1371 = vpop.f32.mrf.mxu0
    %1372 = vdwg.mxu0
    %1373 = vmatpush.bf16.msra.mxu0 %v1298
    %1374 = vmatpush.bf16.msra.mxu0 %v1296
    %1375 = vmatpush.bf16.msra.mxu0 %v1294
    %1376 = vmatpush.bf16.msra.mxu0 %v1292
    %1377 = vmatpush.bf16.msra.mxu0 %v1290
    %1378 = vmatpush.bf16.msra.mxu0 %v1288
    %1379 = vmatpush.bf16.msra.mxu0 %v1286
    %1380 = vmatpush.bf16.msra.mxu0 %v1284
    %1381 = vmatmul.bf16.gmra.mxu0 %v1147
    %v1382 = vpop.f32.mrf.mxu0
    %v1383 = vadd.f32 %v1184, %v1382
    %v1384 = vpop.f32.mrf.mxu0
    %1385 = vdwg.mxu0
    %1386 = vmatpush.bf16.msra.mxu0 %v1314
    %1387 = vmatpush.bf16.msra.mxu0 %v1312
    %1388 = vmatpush.bf16.msra.mxu0 %v1310
    %1389 = vmatpush.bf16.msra.mxu0 %v1308
    %1390 = vmatpush.bf16.msra.mxu0 %v1306
    %1391 = vmatpush.bf16.msra.mxu0 %v1304
    %1392 = vmatpush.bf16.msra.mxu0 %v1302
    %1393 = vmatpush.bf16.msra.mxu0 %v1300
    %1394 = vmatmul.bf16.gmra.mxu0 %v1148
    %v1395 = vpop.f32.mrf.mxu0
    %v1396 = vadd.f32 %v1383, %v1395
    %v1397 = vpop.f32.mrf.mxu0
    %1398 = vdwg.mxu0
    %v1399 = vmax.f32 %v1370, 0.0
    %v1400 = vmax.f32 %v1396, 0.0
    %v1401 = vpack.c.bf16 %v1399, %v1399
    %v1402 = vpack.c.bf16 %v1400, %v1400
    %v1403 = vld [vmem:[#allocation10] sm:$0xff]
    %v1404 = vld [vmem:[#allocation10 + $0x8] sm:$0xff]
    %v1405 = vld [vmem:[#allocation10 + $0x10] sm:$0xff]
    %v1406 = vld [vmem:[#allocation10 + $0x18] sm:$0xff]
    %v1407 = vld [vmem:[#allocation10 + $0x20] sm:$0xff]
    %v1408 = vld [vmem:[#allocation10 + $0x28] sm:$0xff]
    %v1409 = vld [vmem:[#allocation10 + $0x30] sm:$0xff]
    %v1410 = vld [vmem:[#allocation10 + $0x38] sm:$0xff]
    %v1411 = vld [vmem:[#allocation10 + $0x40] sm:$0xff]
    %v1412 = vld [vmem:[#allocation10 + $0x48] sm:$0xff]
    %v1413 = vld [vmem:[#allocation10 + $0x50] sm:$0xff]
    %v1414 = vld [vmem:[#allocation10 + $0x58] sm:$0xff]
    %v1415 = vld [vmem:[#allocation10 + $0x60] sm:$0xff]
    %v1416 = vld [vmem:[#allocation10 + $0x68] sm:$0xff]
    %v1417 = vld [vmem:[#allocation10 + $0x70] sm:$0xff]
    %v1418 = vld [vmem:[#allocation10 + $0x78] sm:$0xff]
    %v1419 = vld [vmem:[#allocation10 + $0x80] sm:$0xff]
    %v1420 = vld [vmem:[#allocation10 + $0x88] sm:$0xff]
    %v1421 = vld [vmem:[#allocation10 + $0x90] sm:$0xff]
    %v1422 = vld [vmem:[#allocation10 + $0x98] sm:$0xff]
    %v1423 = vld [vmem:[#allocation10 + $0xa0] sm:$0xff]
    %v1424 = vld [vmem:[#allocation10 + $0xa8] sm:$0xff]
    %v1425 = vld [vmem:[#allocation10 + $0xb0] sm:$0xff]
    %v1426 = vld [vmem:[#allocation10 + $0xb8] sm:$0xff]
    %v1427 = vld [vmem:[#allocation10 + $0xc0] sm:$0xff]
    %v1428 = vld [vmem:[#allocation10 + $0xc8] sm:$0xff]
    %v1429 = vld [vmem:[#allocation10 + $0xd0] sm:$0xff]
    %v1430 = vld [vmem:[#allocation10 + $0xd8] sm:$0xff]
    %v1431 = vld [vmem:[#allocation10 + $0xe0] sm:$0xff]
    %v1432 = vld [vmem:[#allocation10 + $0xe8] sm:$0xff]
    %v1433 = vld [vmem:[#allocation10 + $0xf0] sm:$0xff]
    %v1434 = vld [vmem:[#allocation10 + $0xf8] sm:$0xff]
    %v1435 = vld [vmem:[%s6] sm:$0x3]
    %v1437 = vperm.slane %v1435, 0
    %v1438 = vperm.slane %v1435, 1
    %v1473 = vunpack.c.l.b16 %v1403
    %v1474 = vunpack.c.h.b16 %v1403
    %v1475 = vunpack.c.l.b16 %v1404
    %v1476 = vunpack.c.h.b16 %v1404
    %v1477 = vunpack.c.l.b16 %v1405
    %v1478 = vunpack.c.h.b16 %v1405
    %v1479 = vunpack.c.l.b16 %v1406
    %v1480 = vunpack.c.h.b16 %v1406
    %v1481 = vunpack.c.l.b16 %v1407
    %v1482 = vunpack.c.h.b16 %v1407
    %v1483 = vunpack.c.l.b16 %v1408
    %v1484 = vunpack.c.h.b16 %v1408
    %v1485 = vunpack.c.l.b16 %v1409
    %v1486 = vunpack.c.h.b16 %v1409
    %v1487 = vunpack.c.l.b16 %v1410
    %v1488 = vunpack.c.h.b16 %v1410
    %v1489 = vunpack.c.l.b16 %v1411
    %v1490 = vunpack.c.h.b16 %v1411
    %v1491 = vunpack.c.l.b16 %v1412
    %v1492 = vunpack.c.h.b16 %v1412
    %v1493 = vunpack.c.l.b16 %v1413
    %v1494 = vunpack.c.h.b16 %v1413
    %v1495 = vunpack.c.l.b16 %v1414
    %v1496 = vunpack.c.h.b16 %v1414
    %v1497 = vunpack.c.l.b16 %v1415
    %v1498 = vunpack.c.h.b16 %v1415
    %v1499 = vunpack.c.l.b16 %v1416
    %v1500 = vunpack.c.h.b16 %v1416
    %v1501 = vunpack.c.l.b16 %v1417
    %v1502 = vunpack.c.h.b16 %v1417
    %v1503 = vunpack.c.l.b16 %v1418
    %v1504 = vunpack.c.h.b16 %v1418
    %v1505 = vunpack.c.l.b16 %v1419
    %v1506 = vunpack.c.h.b16 %v1419
    %v1507 = vunpack.c.l.b16 %v1420
    %v1508 = vunpack.c.h.b16 %v1420
    %v1509 = vunpack.c.l.b16 %v1421
    %v1510 = vunpack.c.h.b16 %v1421
    %v1511 = vunpack.c.l.b16 %v1422
    %v1512 = vunpack.c.h.b16 %v1422
    %v1513 = vunpack.c.l.b16 %v1423
    %v1514 = vunpack.c.h.b16 %v1423
    %v1515 = vunpack.c.l.b16 %v1424
    %v1516 = vunpack.c.h.b16 %v1424
    %v1517 = vunpack.c.l.b16 %v1425
    %v1518 = vunpack.c.h.b16 %v1425
    %v1519 = vunpack.c.l.b16 %v1426
    %v1520 = vunpack.c.h.b16 %v1426
    %v1521 = vunpack.c.l.b16 %v1427
    %v1522 = vunpack.c.h.b16 %v1427
    %v1523 = vunpack.c.l.b16 %v1428
    %v1524 = vunpack.c.h.b16 %v1428
    %v1525 = vunpack.c.l.b16 %v1429
    %v1526 = vunpack.c.h.b16 %v1429
    %v1527 = vunpack.c.l.b16 %v1430
    %v1528 = vunpack.c.h.b16 %v1430
    %v1529 = vunpack.c.l.b16 %v1431
    %v1530 = vunpack.c.h.b16 %v1431
    %v1531 = vunpack.c.l.b16 %v1432
    %v1532 = vunpack.c.h.b16 %v1432
    %v1533 = vunpack.c.l.b16 %v1433
    %v1534 = vunpack.c.h.b16 %v1433
    %v1535 = vunpack.c.l.b16 %v1434
    %v1536 = vunpack.c.h.b16 %v1434
    %v1537 = vpack.c.b16 %v1475, %v1473
    %v1538 = vpack.c.b16 %v1476, %v1474
    %v1539 = vpack.c.b16 %v1479, %v1477
    %v1540 = vpack.c.b16 %v1480, %v1478
    %v1541 = vpack.c.b16 %v1483, %v1481
    %v1542 = vpack.c.b16 %v1484, %v1482
    %v1543 = vpack.c.b16 %v1487, %v1485
    %v1544 = vpack.c.b16 %v1488, %v1486
    %v1545 = vpack.c.b16 %v1491, %v1489
    %v1546 = vpack.c.b16 %v1492, %v1490
    %v1547 = vpack.c.b16 %v1495, %v1493
    %v1548 = vpack.c.b16 %v1496, %v1494
    %v1549 = vpack.c.b16 %v1499, %v1497
    %v1550 = vpack.c.b16 %v1500, %v1498
    %v1551 = vpack.c.b16 %v1503, %v1501
    %v1552 = vpack.c.b16 %v1504, %v1502
    %v1553 = vpack.c.b16 %v1507, %v1505
    %v1554 = vpack.c.b16 %v1508, %v1506
    %v1555 = vpack.c.b16 %v1511, %v1509
    %v1556 = vpack.c.b16 %v1512, %v1510
    %v1557 = vpack.c.b16 %v1515, %v1513
    %v1558 = vpack.c.b16 %v1516, %v1514
    %v1559 = vpack.c.b16 %v1519, %v1517
    %v1560 = vpack.c.b16 %v1520, %v1518
    %v1561 = vpack.c.b16 %v1523, %v1521
    %v1562 = vpack.c.b16 %v1524, %v1522
    %v1563 = vpack.c.b16 %v1527, %v1525
    %v1564 = vpack.c.b16 %v1528, %v1526
    %v1565 = vpack.c.b16 %v1531, %v1529
    %v1566 = vpack.c.b16 %v1532, %v1530
    %v1567 = vpack.c.b16 %v1535, %v1533
    %v1568 = vpack.c.b16 %v1536, %v1534
    %1601 = vmatpush.bf16.msra.mxu0 %v1551
    %1602 = vmatpush.bf16.msra.mxu0 %v1549
    %1603 = vmatpush.bf16.msra.mxu0 %v1547
    %1604 = vmatpush.bf16.msra.mxu0 %v1545
    %1605 = vmatpush.bf16.msra.mxu0 %v1543
    %1606 = vmatpush.bf16.msra.mxu0 %v1541
    %1607 = vmatpush.bf16.msra.mxu0 %v1539
    %1608 = vmatpush.bf16.msra.mxu0 %v1537
    %1609 = vmatmul.bf16.gmra.mxu0 %v1401
    %v1610 = vpop.f32.mrf.mxu0
    %v1611 = vadd.f32 %v1437, %v1610
    %v1612 = vpop.f32.mrf.mxu0
    %1613 = vdwg.mxu0
    %1614 = vmatpush.bf16.msra.mxu0 %v1567
    %1615 = vmatpush.bf16.msra.mxu0 %v1565
    %1616 = vmatpush.bf16.msra.mxu0 %v1563
    %1617 = vmatpush.bf16.msra.mxu0 %v1561
    %1618 = vmatpush.bf16.msra.mxu0 %v1559
    %1619 = vmatpush.bf16.msra.mxu0 %v1557
    %1620 = vmatpush.bf16.msra.mxu0 %v1555
    %1621 = vmatpush.bf16.msra.mxu0 %v1553
    %1622 = vmatmul.bf16.gmra.mxu0 %v1402
    %v1623 = vpop.f32.mrf.mxu0
    %v1624 = vadd.f32 %v1611, %v1623
    %v1625 = vpop.f32.mrf.mxu0
    %1626 = vdwg.mxu0
    %1627 = vmatpush.bf16.msra.mxu0 %v1552
    %1628 = vmatpush.bf16.msra.mxu0 %v1550
    %1629 = vmatpush.bf16.msra.mxu0 %v1548
    %1630 = vmatpush.bf16.msra.mxu0 %v1546
    %1631 = vmatpush.bf16.msra.mxu0 %v1544
    %1632 = vmatpush.bf16.msra.mxu0 %v1542
    %1633 = vmatpush.bf16.msra.mxu0 %v1540
    %1634 = vmatpush.bf16.msra.mxu0 %v1538
    %1635 = vmatmul.bf16.gmra.mxu0 %v1401
    %v1636 = vpop.f32.mrf.mxu0
    %v1637 = vadd.f32 %v1438, %v1636
    %v1638 = vpop.f32.mrf.mxu0
    %1639 = vdwg.mxu0
    %1640 = vmatpush.bf16.msra.mxu0 %v1568
    %1641 = vmatpush.bf16.msra.mxu0 %v1566
    %1642 = vmatpush.bf16.msra.mxu0 %v1564
    %1643 = vmatpush.bf16.msra.mxu0 %v1562
    %1644 = vmatpush.bf16.msra.mxu0 %v1560
    %1645 = vmatpush.bf16.msra.mxu0 %v1558
    %1646 = vmatpush.bf16.msra.mxu0 %v1556
    %1647 = vmatpush.bf16.msra.mxu0 %v1554
    %1648 = vmatmul.bf16.gmra.mxu0 %v1402
    %v1649 = vpop.f32.mrf.mxu0
    %v1650 = vadd.f32 %v1637, %v1649
    %v1651 = vpop.f32.mrf.mxu0
    %1652 = vdwg.mxu0
    %v1653 = vmax.f32 %v1624, 0.0
    %v1654 = vmax.f32 %v1650, 0.0
    %v1655 = vpack.c.bf16 %v1653, %v1653
    %v1656 = vpack.c.bf16 %v1654, %v1654
    %v1657 = vld [vmem:[#allocation11] sm:$0xff]
    %v1658 = vld [vmem:[#allocation11 + $0x8] sm:$0xff]
    %v1659 = vld [vmem:[#allocation11 + $0x10] sm:$0xff]
    %v1660 = vld [vmem:[#allocation11 + $0x18] sm:$0xff]
    %v1661 = vld [vmem:[#allocation11 + $0x20] sm:$0xff]
    %v1662 = vld [vmem:[#allocation11 + $0x28] sm:$0xff]
    %v1663 = vld [vmem:[#allocation11 + $0x30] sm:$0xff]
    %v1664 = vld [vmem:[#allocation11 + $0x38] sm:$0xff]
    %v1665 = vld [vmem:[#allocation11 + $0x40] sm:$0xff]
    %v1666 = vld [vmem:[#allocation11 + $0x48] sm:$0xff]
    %v1667 = vld [vmem:[#allocation11 + $0x50] sm:$0xff]
    %v1668 = vld [vmem:[#allocation11 + $0x58] sm:$0xff]
    %v1669 = vld [vmem:[#allocation11 + $0x60] sm:$0xff]
    %v1670 = vld [vmem:[#allocation11 + $0x68] sm:$0xff]
    %v1671 = vld [vmem:[#allocation11 + $0x70] sm:$0xff]
    %v1672 = vld [vmem:[#allocation11 + $0x78] sm:$0xff]
    %v1673 = vld [vmem:[#allocation11 + $0x80] sm:$0xff]
    %v1674 = vld [vmem:[#allocation11 + $0x88] sm:$0xff]
    %v1675 = vld [vmem:[#allocation11 + $0x90] sm:$0xff]
    %v1676 = vld [vmem:[#allocation11 + $0x98] sm:$0xff]
    %v1677 = vld [vmem:[#allocation11 + $0xa0] sm:$0xff]
    %v1678 = vld [vmem:[#allocation11 + $0xa8] sm:$0xff]
    %v1679 = vld [vmem:[#allocation11 + $0xb0] sm:$0xff]
    %v1680 = vld [vmem:[#allocation11 + $0xb8] sm:$0xff]
    %v1681 = vld [vmem:[#allocation11 + $0xc0] sm:$0xff]
    %v1682 = vld [vmem:[#allocation11 + $0xc8] sm:$0xff]
    %v1683 = vld [vmem:[#allocation11 + $0xd0] sm:$0xff]
    %v1684 = vld [vmem:[#allocation11 + $0xd8] sm:$0xff]
    %v1685 = vld [vmem:[#allocation11 + $0xe0] sm:$0xff]
    %v1686 = vld [vmem:[#allocation11 + $0xe8] sm:$0xff]
    %v1687 = vld [vmem:[#allocation11 + $0xf0] sm:$0xff]
    %v1688 = vld [vmem:[#allocation11 + $0xf8] sm:$0xff]
    %v1689 = vld [vmem:[%s8] sm:$0x3]
    %v1691 = vperm.slane %v1689, 0
    %v1692 = vperm.slane %v1689, 1
    %v1727 = vunpack.c.l.b16 %v1657
    %v1728 = vunpack.c.h.b16 %v1657
    %v1729 = vunpack.c.l.b16 %v1658
    %v1730 = vunpack.c.h.b16 %v1658
    %v1731 = vunpack.c.l.b16 %v1659
    %v1732 = vunpack.c.h.b16 %v1659
    %v1733 = vunpack.c.l.b16 %v1660
    %v1734 = vunpack.c.h.b16 %v1660
    %v1735 = vunpack.c.l.b16 %v1661
    %v1736 = vunpack.c.h.b16 %v1661
    %v1737 = vunpack.c.l.b16 %v1662
    %v1738 = vunpack.c.h.b16 %v1662
    %v1739 = vunpack.c.l.b16 %v1663
    %v1740 = vunpack.c.h.b16 %v1663
    %v1741 = vunpack.c.l.b16 %v1664
    %v1742 = vunpack.c.h.b16 %v1664
    %v1743 = vunpack.c.l.b16 %v1665
    %v1744 = vunpack.c.h.b16 %v1665
    %v1745 = vunpack.c.l.b16 %v1666
    %v1746 = vunpack.c.h.b16 %v1666
    %v1747 = vunpack.c.l.b16 %v1667
    %v1748 = vunpack.c.h.b16 %v1667
    %v1749 = vunpack.c.l.b16 %v1668
    %v1750 = vunpack.c.h.b16 %v1668
    %v1751 = vunpack.c.l.b16 %v1669
    %v1752 = vunpack.c.h.b16 %v1669
    %v1753 = vunpack.c.l.b16 %v1670
    %v1754 = vunpack.c.h.b16 %v1670
    %v1755 = vunpack.c.l.b16 %v1671
    %v1756 = vunpack.c.h.b16 %v1671
    %v1757 = vunpack.c.l.b16 %v1672
    %v1758 = vunpack.c.h.b16 %v1672
    %v1759 = vunpack.c.l.b16 %v1673
    %v1760 = vunpack.c.h.b16 %v1673
    %v1761 = vunpack.c.l.b16 %v1674
    %v1762 = vunpack.c.h.b16 %v1674
    %v1763 = vunpack.c.l.b16 %v1675
    %v1764 = vunpack.c.h.b16 %v1675
    %v1765 = vunpack.c.l.b16 %v1676
    %v1766 = vunpack.c.h.b16 %v1676
    %v1767 = vunpack.c.l.b16 %v1677
    %v1768 = vunpack.c.h.b16 %v1677
    %v1769 = vunpack.c.l.b16 %v1678
    %v1770 = vunpack.c.h.b16 %v1678
    %v1771 = vunpack.c.l.b16 %v1679
    %v1772 = vunpack.c.h.b16 %v1679
    %v1773 = vunpack.c.l.b16 %v1680
    %v1774 = vunpack.c.h.b16 %v1680
    %v1775 = vunpack.c.l.b16 %v1681
    %v1776 = vunpack.c.h.b16 %v1681
    %v1777 = vunpack.c.l.b16 %v1682
    %v1778 = vunpack.c.h.b16 %v1682
    %v1779 = vunpack.c.l.b16 %v1683
    %v1780 = vunpack.c.h.b16 %v1683
    %v1781 = vunpack.c.l.b16 %v1684
    %v1782 = vunpack.c.h.b16 %v1684
    %v1783 = vunpack.c.l.b16 %v1685
    %v1784 = vunpack.c.h.b16 %v1685
    %v1785 = vunpack.c.l.b16 %v1686
    %v1786 = vunpack.c.h.b16 %v1686
    %v1787 = vunpack.c.l.b16 %v1687
    %v1788 = vunpack.c.h.b16 %v1687
    %v1789 = vunpack.c.l.b16 %v1688
    %v1790 = vunpack.c.h.b16 %v1688
    %v1791 = vpack.c.b16 %v1729, %v1727
    %v1792 = vpack.c.b16 %v1730, %v1728
    %v1793 = vpack.c.b16 %v1733, %v1731
    %v1794 = vpack.c.b16 %v1734, %v1732
    %v1795 = vpack.c.b16 %v1737, %v1735
    %v1796 = vpack.c.b16 %v1738, %v1736
    %v1797 = vpack.c.b16 %v1741, %v1739
    %v1798 = vpack.c.b16 %v1742, %v1740
    %v1799 = vpack.c.b16 %v1745, %v1743
    %v1800 = vpack.c.b16 %v1746, %v1744
    %v1801 = vpack.c.b16 %v1749, %v1747
    %v1802 = vpack.c.b16 %v1750, %v1748
    %v1803 = vpack.c.b16 %v1753, %v1751
    %v1804 = vpack.c.b16 %v1754, %v1752
    %v1805 = vpack.c.b16 %v1757, %v1755
    %v1806 = vpack.c.b16 %v1758, %v1756
    %v1807 = vpack.c.b16 %v1761, %v1759
    %v1808 = vpack.c.b16 %v1762, %v1760
    %v1809 = vpack.c.b16 %v1765, %v1763
    %v1810 = vpack.c.b16 %v1766, %v1764
    %v1811 = vpack.c.b16 %v1769, %v1767
    %v1812 = vpack.c.b16 %v1770, %v1768
    %v1813 = vpack.c.b16 %v1773, %v1771
    %v1814 = vpack.c.b16 %v1774, %v1772
    %v1815 = vpack.c.b16 %v1777, %v1775
    %v1816 = vpack.c.b16 %v1778, %v1776
    %v1817 = vpack.c.b16 %v1781, %v1779
    %v1818 = vpack.c.b16 %v1782, %v1780
    %v1819 = vpack.c.b16 %v1785, %v1783
    %v1820 = vpack.c.b16 %v1786, %v1784
    %v1821 = vpack.c.b16 %v1789, %v1787
    %v1822 = vpack.c.b16 %v1790, %v1788
    %1855 = vmatpush.bf16.msra.mxu0 %v1805
    %1856 = vmatpush.bf16.msra.mxu0 %v1803
    %1857 = vmatpush.bf16.msra.mxu0 %v1801
    %1858 = vmatpush.bf16.msra.mxu0 %v1799
    %1859 = vmatpush.bf16.msra.mxu0 %v1797
    %1860 = vmatpush.bf16.msra.mxu0 %v1795
    %1861 = vmatpush.bf16.msra.mxu0 %v1793
    %1862 = vmatpush.bf16.msra.mxu0 %v1791
    %1863 = vmatmul.bf16.gmra.mxu0 %v1655
    %v1864 = vpop.f32.mrf.mxu0
    %v1865 = vadd.f32 %v1691, %v1864
    %v1866 = vpop.f32.mrf.mxu0
    %1867 = vdwg.mxu0
    %1868 = vmatpush.bf16.msra.mxu0 %v1821
    %1869 = vmatpush.bf16.msra.mxu0 %v1819
    %1870 = vmatpush.bf16.msra.mxu0 %v1817
    %1871 = vmatpush.bf16.msra.mxu0 %v1815
    %1872 = vmatpush.bf16.msra.mxu0 %v1813
    %1873 = vmatpush.bf16.msra.mxu0 %v1811
    %1874 = vmatpush.bf16.msra.mxu0 %v1809
    %1875 = vmatpush.bf16.msra.mxu0 %v1807
    %1876 = vmatmul.bf16.gmra.mxu0 %v1656
    %v1877 = vpop.f32.mrf.mxu0
    %v1878 = vadd.f32 %v1865, %v1877
    %v1879 = vpop.f32.mrf.mxu0
    %1880 = vdwg.mxu0
    %1881 = vmatpush.bf16.msra.mxu0 %v1806
    %1882 = vmatpush.bf16.msra.mxu0 %v1804
    %1883 = vmatpush.bf16.msra.mxu0 %v1802
    %1884 = vmatpush.bf16.msra.mxu0 %v1800
    %1885 = vmatpush.bf16.msra.mxu0 %v1798
    %1886 = vmatpush.bf16.msra.mxu0 %v1796
    %1887 = vmatpush.bf16.msra.mxu0 %v1794
    %1888 = vmatpush.bf16.msra.mxu0 %v1792
    %1889 = vmatmul.bf16.gmra.mxu0 %v1655
    %v1890 = vpop.f32.mrf.mxu0
    %v1891 = vadd.f32 %v1692, %v1890
    %v1892 = vpop.f32.mrf.mxu0
    %1893 = vdwg.mxu0
    %1894 = vmatpush.bf16.msra.mxu0 %v1822
    %1895 = vmatpush.bf16.msra.mxu0 %v1820
    %1896 = vmatpush.bf16.msra.mxu0 %v1818
    %1897 = vmatpush.bf16.msra.mxu0 %v1816
    %1898 = vmatpush.bf16.msra.mxu0 %v1814
    %1899 = vmatpush.bf16.msra.mxu0 %v1812
    %1900 = vmatpush.bf16.msra.mxu0 %v1810
    %1901 = vmatpush.bf16.msra.mxu0 %v1808
    %1902 = vmatmul.bf16.gmra.mxu0 %v1656
    %v1903 = vpop.f32.mrf.mxu0
    %v1904 = vadd.f32 %v1891, %v1903
    %v1905 = vpop.f32.mrf.mxu0
    %1906 = vdwg.mxu0
    %v1907 = vmax.f32 %v1878, 0.0
    %v1908 = vmax.f32 %v1904, 0.0
    %v1909 = vpack.c.bf16 %v1907, %v1907
    %v1910 = vpack.c.bf16 %v1908, %v1908
    %v1911 = vld [vmem:[#allocation13] sm:$0xf]
    %v1912 = vld [vmem:[#allocation13 + $0x4] sm:$0xf]
    %v1913 = vld [vmem:[#allocation13 + $0x8] sm:$0xf]
    %v1914 = vld [vmem:[#allocation13 + $0xc] sm:$0xf]
    %v1915 = vld [vmem:[#allocation13 + $0x10] sm:$0xf]
    %v1916 = vld [vmem:[#allocation13 + $0x14] sm:$0xf]
    %v1917 = vld [vmem:[#allocation13 + $0x18] sm:$0xf]
    %v1918 = vld [vmem:[#allocation13 + $0x1c] sm:$0xf]
    %v1919 = vld [vmem:[#allocation13 + $0x20] sm:$0xf]
    %v1920 = vld [vmem:[#allocation13 + $0x24] sm:$0xf]
    %v1921 = vld [vmem:[#allocation13 + $0x28] sm:$0xf]
    %v1922 = vld [vmem:[#allocation13 + $0x2c] sm:$0xf]
    %v1923 = vld [vmem:[#allocation13 + $0x30] sm:$0xf]
    %v1924 = vld [vmem:[#allocation13 + $0x34] sm:$0xf]
    %v1925 = vld [vmem:[#allocation13 + $0x38] sm:$0xf]
    %v1926 = vld [vmem:[#allocation13 + $0x3c] sm:$0xf]
    %v1927 = vld [vmem:[#allocation13 + $0x40] sm:$0xf]
    %v1928 = vld [vmem:[#allocation13 + $0x44] sm:$0xf]
    %v1929 = vld [vmem:[#allocation13 + $0x48] sm:$0xf]
    %v1930 = vld [vmem:[#allocation13 + $0x4c] sm:$0xf]
    %v1931 = vld [vmem:[#allocation13 + $0x50] sm:$0xf]
    %v1932 = vld [vmem:[#allocation13 + $0x54] sm:$0xf]
    %v1933 = vld [vmem:[#allocation13 + $0x58] sm:$0xf]
    %v1934 = vld [vmem:[#allocation13 + $0x5c] sm:$0xf]
    %v1935 = vld [vmem:[#allocation13 + $0x60] sm:$0xf]
    %v1936 = vld [vmem:[#allocation13 + $0x64] sm:$0xf]
    %v1937 = vld [vmem:[#allocation13 + $0x68] sm:$0xf]
    %v1938 = vld [vmem:[#allocation13 + $0x6c] sm:$0xf]
    %v1939 = vld [vmem:[#allocation13 + $0x70] sm:$0xf]
    %v1940 = vld [vmem:[#allocation13 + $0x74] sm:$0xf]
    %v1941 = vld [vmem:[#allocation13 + $0x78] sm:$0xf]
    %v1942 = vld [vmem:[#allocation13 + $0x7c] sm:$0xf]
    %v1943 = vld [vmem:[%s10] sm:$0x1]
    %v1945 = vperm.slane %v1943, 0
    %v1979 = vunpack.c.l.b16 %v1911
    %v1980 = vunpack.c.l.b16 %v1912
    %v1981 = vunpack.c.l.b16 %v1913
    %v1982 = vunpack.c.l.b16 %v1914
    %v1983 = vunpack.c.l.b16 %v1915
    %v1984 = vunpack.c.l.b16 %v1916
    %v1985 = vunpack.c.l.b16 %v1917
    %v1986 = vunpack.c.l.b16 %v1918
    %v1987 = vunpack.c.l.b16 %v1919
    %v1988 = vunpack.c.l.b16 %v1920
    %v1989 = vunpack.c.l.b16 %v1921
    %v1990 = vunpack.c.l.b16 %v1922
    %v1991 = vunpack.c.l.b16 %v1923
    %v1992 = vunpack.c.l.b16 %v1924
    %v1993 = vunpack.c.l.b16 %v1925
    %v1994 = vunpack.c.l.b16 %v1926
    %v1995 = vunpack.c.l.b16 %v1927
    %v1996 = vunpack.c.l.b16 %v1928
    %v1997 = vunpack.c.l.b16 %v1929
    %v1998 = vunpack.c.l.b16 %v1930
    %v1999 = vunpack.c.l.b16 %v1931
    %v2000 = vunpack.c.l.b16 %v1932
    %v2001 = vunpack.c.l.b16 %v1933
    %v2002 = vunpack.c.l.b16 %v1934
    %v2003 = vunpack.c.l.b16 %v1935
    %v2004 = vunpack.c.l.b16 %v1936
    %v2005 = vunpack.c.l.b16 %v1937
    %v2006 = vunpack.c.l.b16 %v1938
    %v2007 = vunpack.c.l.b16 %v1939
    %v2008 = vunpack.c.l.b16 %v1940
    %v2009 = vunpack.c.l.b16 %v1941
    %v2010 = vunpack.c.l.b16 %v1942
    %v2011 = vpack.c.b16 %v1980, %v1979
    %v2012 = vpack.c.b16 %v1982, %v1981
    %v2013 = vpack.c.b16 %v1984, %v1983
    %v2014 = vpack.c.b16 %v1986, %v1985
    %v2015 = vpack.c.b16 %v1988, %v1987
    %v2016 = vpack.c.b16 %v1990, %v1989
    %v2017 = vpack.c.b16 %v1992, %v1991
    %v2018 = vpack.c.b16 %v1994, %v1993
    %v2019 = vpack.c.b16 %v1996, %v1995
    %v2020 = vpack.c.b16 %v1998, %v1997
    %v2021 = vpack.c.b16 %v2000, %v1999
    %v2022 = vpack.c.b16 %v2002, %v2001
    %v2023 = vpack.c.b16 %v2004, %v2003
    %v2024 = vpack.c.b16 %v2006, %v2005
    %v2025 = vpack.c.b16 %v2008, %v2007
    %v2026 = vpack.c.b16 %v2010, %v2009
    %2043 = vmatpush.bf16.msra.mxu0 %v2018
    %2044 = vmatpush.bf16.msra.mxu0 %v2017
    %2045 = vmatpush.bf16.msra.mxu0 %v2016
    %2046 = vmatpush.bf16.msra.mxu0 %v2015
    %2047 = vmatpush.bf16.msra.mxu0 %v2014
    %2048 = vmatpush.bf16.msra.mxu0 %v2013
    %2049 = vmatpush.bf16.msra.mxu0 %v2012
    %2050 = vmatpush.bf16.msra.mxu0 %v2011
    %2051 = vmatmul.bf16.gmra.mxu0 %v1909
    %v2052 = vpop.f32.mrf.mxu0
    %v2053 = vadd.f32 %v1945, %v2052
    %v2054 = vpop.f32.mrf.mxu0
    %2055 = vdwg.mxu0
    %2056 = vmatpush.bf16.msra.mxu0 %v2026
    %2057 = vmatpush.bf16.msra.mxu0 %v2025
    %2058 = vmatpush.bf16.msra.mxu0 %v2024
    %2059 = vmatpush.bf16.msra.mxu0 %v2023
    %2060 = vmatpush.bf16.msra.mxu0 %v2022
    %2061 = vmatpush.bf16.msra.mxu0 %v2021
    %2062 = vmatpush.bf16.msra.mxu0 %v2020
    %2063 = vmatpush.bf16.msra.mxu0 %v2019
    %2064 = vmatmul.bf16.gmra.mxu0 %v1910
    %v2065 = vpop.f32.mrf.mxu0
    %v2066 = vadd.f32 %v2053, %v2065
    %v2067 = vpop.f32.mrf.mxu0
    %2068 = vdwg.mxu0
    %v2069 = vsub.f32 0.0, %v2066
    %v2070 = vmul.f32 %v2069, 1.442695
    %v2071 = vpow.pop %v2070
    %v2072 = vadd.f32 %v2071, 1.0
    %v2073 = vrcp.pop %v2072
    %v2074 = vlaneseq
    %v2075 = vand.u32 %v2074, 127
    %vm2076 = vcmp.ge.s32.totalorder %v2075, 32
    %vm2077 = vcmp.lt.s32.totalorder %v2075, 64
    %vm2078 = vmand %vm2076, %vm2077
    %v2079 = vsel %vm2078, %v2073, %v2066
    %2080 = vst [vmem:[#allocation14] sm:$0x3] %v2079
    // Predicated region
    $region74: #{tpu_custom_call.1} parent=1 // pred_check
      _
    $region75: #{tpu_custom_call.1} parent=1 // pred_check_branch
      %2082 = sbr.rel (0) target = $region77
    $region76: #{tpu_custom_call.1} parent=1 // pred_region
      %2084 = vsyncadd [#allocation4], 0
      %s2086 = sshll.u32 [#allocation14], 4
      %s2087 = int_to_ptr.vmem [resolvable:$true] %s2086
      %s2088 = sshll.u32 %s11, 4
      %s2089 = int_to_ptr.hbm [resolvable:$true] %s2088
      %2091 = dma.vmem_to_hbm [thread:$0]  %s2087, 32, %s2089, [#allocation4]
    $region77: #{tpu_custom_call.1} parent=1 // pred_fallthru
      _
    // Predicated region
    $region78: #{tpu_custom_call.1} parent=1 // pred_check
      _
    $region79: #{tpu_custom_call.1} parent=1 // pred_check_branch
      %2093 = sbr.rel (0) target = $region81
    $region80: #{tpu_custom_call.1} parent=1 // pred_region
      %2095 = dma.done [#allocation4], 32
    $region81: #{tpu_custom_call.1} parent=1 // pred_fallthru
      _
    %2096 = vsyncpa [#allocation3], 1
    %2097 = vsyncpa [#allocation6], 1
    %2098 = vsyncpa [#allocation9], 1
    %2099 = vsyncpa [#allocation12], 1
    %2100 = vsyncpa [#allocation4], 1

</llo_original>
